<compile_context>
chip_gen: v6e
topology: v6e:2x2x1
jax: 0.10.0
libtpu: 0.0.40
codegen_flags: <defaults>
</compile_context>

<pallas_src>
import math

import jax
import jax.numpy as jnp
from jax import lax
from jax.experimental import pallas as pl
from jax.experimental.pallas import tpu as pltpu


def h_constructor_forward(inputs, edges_mu, edges_logsigma, noise,
                          wq, bq, wk, bk, wv, bv,
                          w1, b1, w2, b2,
                          g_in, beta_in, g_e, beta_e,
                          *, k_n, k_e, iters=1, eps=1e-8, ln_eps=1e-5):
    """Pallas implementation of HConstructor.forward.

    inputs: (n, d) float32, noise: (n_s, d) float32.
    Returns (edges (n_s, d), H (n, n_s), dots (n, n_s)) — as the module does.
    """
    assert iters >= 1
    n, d = inputs.shape
    n_s = noise.shape[0]
    hidden = w1.shape[0]
    scale = float(d) ** (-0.5)
    bias_w = max(3 * d, hidden)

    # ---- one-time parameter packing (wrapper side) ---------------------------
    # All d-length per-feature vectors share one array (one DMA / one VMEM tile):
    #   rows: 0 gamma_in, 1 beta_in, 2 gamma_e, 3 beta_e, 4 bq, 5 bk, 6 b2,
    #         7 edges_mu, 8 edges_logsigma
    vecs = jnp.stack(
        [g_in, beta_in, g_e, beta_e, bq, bk, b2,
         edges_mu.reshape(-1), edges_logsigma.reshape(-1)],
        axis=0).astype(jnp.float32)
    # Wide biases packed together: row 0 = [bq|bk|bv] (fused QKV), row 1 = b1.
    biases = jnp.zeros((2, bias_w), jnp.float32)
    biases = biases.at[0, :3 * d].set(jnp.concatenate([bq, bk, bv]))
    biases = biases.at[1, :hidden].set(b1)
    # Fused QKV projection weight of the (normalised) inputs: one MXU pass.
    w_qkv_t = jnp.concatenate([wq.T, wk.T, wv.T], axis=1).astype(jnp.float32)
    # W1 split into the halves multiplying `edges` / `updates` (kills the concat).
    w1a_t = jnp.asarray(w1[:, :d].T, jnp.float32)   # (d, hidden)
    w1b_t = jnp.asarray(w1[:, d:].T, jnp.float32)   # (d, hidden)

    def kernel(x_ref, noise_ref, vec_ref, bias_ref,
               wqkv_ref, wq_ref, wk_ref, w1a_ref, w1b_ref, w2_ref,
               edges_out_ref, h_out_ref, dots_out_ref):
        f32 = jnp.float32

        def row(r):                                   # (1, d) per-feature vector
            return vec_ref[r:r + 1, :]

        def layer_norm(z, gamma, beta):
            mu = jnp.mean(z, axis=-1, keepdims=True)
            zc = z - mu
            var = jnp.mean(zc * zc, axis=-1, keepdims=True)
            return zc * lax.rsqrt(var + ln_eps) * gamma + beta

        def relu(z):
            return jnp.maximum(z, 0.0)

        def mm(a, b):                                  # a @ b       (MXU, f32 acc)
            return jnp.dot(a, b, preferred_element_type=f32)

        def mm_bt(a, b):                               # a @ b.T
            return jnp.dot(a, b.T, preferred_element_type=f32)

        def keep_topk(a, kk, row_len):
            # Keep the kk largest entries of each row, zero the rest.
            # Threshold-based — identical to torch.topk masking for distinct
            # values.  Peel from the cheaper side: min(kk, row_len-kk) passes.
            drop = row_len - kk
            if drop <= 0:
                return a
            if kk <= drop:
                work = a
                for _ in range(kk):                    # kk-th largest threshold
                    thr = jnp.max(work, axis=-1, keepdims=True)
                    work = jnp.where(work >= thr, f32(-1e30), work)
                return jnp.where(a >= thr, a, f32(0.0))
            work = a                                   # (row_len-kk)-th smallest
            for _ in range(drop):
                thr = jnp.min(work, axis=-1, keepdims=True)
                work = jnp.where(work <= thr, f32(1e30), work)
            return jnp.where(a > thr, a, f32(0.0))

        gamma_in, beta_in_ = row(0), row(1)
        gamma_e, beta_e_ = row(2), row(3)
        bq_v, bk_v, b2_v = row(4), row(5), row(6)
        mu_v, logsig_v = row(7), row(8)

        # Reparameterised edge sampling: edges = mu + exp(logsigma) * noise.
        edges = mu_v + jnp.exp(logsig_v) * noise_ref[...]          # (n_s, d)

        # inputs = norm_input(inputs); fused to_q/to_k/to_v (single MXU pass).
        xn = layer_norm(x_ref[...], gamma_in, beta_in_)             # (n, d)
        qkv = mm(xn, wqkv_ref[...]) + bias_ref[0:1, 0:3 * d]        # (n, 3d)
        q_in = qkv[:, 0:d]                                          # to_q(inputs), no ReLU
        k = relu(qkv[:, d:2 * d])                                   # act(to_k(inputs))
        v = relu(qkv[:, 2 * d:3 * d])                               # act(to_v(inputs))

        b1_v = bias_ref[1:2, 0:hidden]
        h = None
        dots2 = None

        for _ in range(iters):                                      # static; default 1
            # edges = norm_edgs(edges); q = act(to_q(edges))
            e = layer_norm(edges, gamma_e, beta_e_)
            q_e = relu(mm(e, wq_ref[...]) + bq_v)
            dots1 = mm_bt(q_e, k) * scale                           # (n_s, n)
            # softmax(dim=1) + eps, renormalise (exact division: overhead-bound).
            m1 = jnp.max(dots1, axis=-1, keepdims=True)
            p1 = jnp.exp(dots1 - m1)
            attn = p1 / jnp.sum(p1, axis=-1, keepdims=True) + eps
            attn = attn / jnp.sum(attn, axis=-1, keepdims=True)
            attn = keep_topk(attn, k_n, n)                          # mask_attn(attn, k_n)
            updates = mm(attn, v)                                   # (n_s, d)

            # mlp(cat(e, updates)) with the concat folded into split W1 halves.
            hmid = relu(mm(e, w1a_ref[...]) + mm(updates, w1b_ref[...]) + b1_v)
            edges = mm(hmid, w2_ref[...]) + b2_v                    # (n_s, d)

            # Second attention over the new edges -> H / dots.
            k = relu(mm(edges, wk_ref[...]) + bk_v)                 # act(to_k(edges))
            # v = act(v) in the reference is a no-op (v is already >= 0).
            dots2 = mm_bt(q_in, k) * scale                          # (n, n_s)
            m2 = jnp.max(dots2, axis=-1, keepdims=True)
            p2 = jnp.exp(dots2 - m2)
            attn_v = p2 / jnp.sum(p2, axis=-1, keepdims=True)
            h = keep_topk(attn_v, k_e, n_s)                         # mask_attn(attn_v, k_e)

        edges_out_ref[...] = edges
        h_out_ref[...] = h
        dots_out_ref[...] = dots2

    vmem = pl.BlockSpec(memory_space=pltpu.MemorySpace.VMEM)
    edges_out, h_out, dots_out = pl.pallas_call(
        kernel,
        out_shape=(
            jax.ShapeDtypeStruct((n_s, d), jnp.float32),
            jax.ShapeDtypeStruct((n, n_s), jnp.float32),
            jax.ShapeDtypeStruct((n, n_s), jnp.float32),
        ),
        in_specs=[vmem] * 10,
        out_specs=(vmem, vmem, vmem),
    )(
        inputs.astype(jnp.float32), noise.astype(jnp.float32),
        vecs, biases, w_qkv_t,
        jnp.asarray(wq.T, jnp.float32), jnp.asarray(wk.T, jnp.float32),
        w1a_t, w1b_t, jnp.asarray(w2.T, jnp.float32),
    )
    return edges_out, h_out, dots_out


def _reference(inputs, edges_mu, edges_logsigma, noise,
               wq, bq, wk, bk, wv, bv, w1, b1, w2, b2,
               g_in, beta_in, g_e, beta_e, *, k_n, k_e, eps=1e-8, ln_eps=1e-5):
    """Pure-JAX replica of the PyTorch forward (AB not in {'0','1'}, iters=1)."""
    n, d = inputs.shape
    scale = float(d) ** (-0.5)

    def ln(z, g, b):
        mu = z.mean(-1, keepdims=True)
        var = ((z - mu) ** 2).mean(-1, keepdims=True)
        return (z - mu) * lax.rsqrt(var + ln_eps) * g + b

    def topk_mask(a, kk):
        thr = lax.top_k(a, kk)[0][..., kk - 1:kk]
        return jnp.where(a >= thr, a, 0.0)

    relu = lambda z: jnp.maximum(z, 0.0)

    edges = edges_mu + jnp.exp(edges_logsigma) * noise
    xn = ln(inputs, g_in, beta_in)
    k = relu(xn @ wk.T + bk)
    v = relu(xn @ wv.T + bv)

    e = ln(edges, g_e, beta_e)
    q = relu(e @ wq.T + bq)
    dots1 = (q @ k.T) * scale
    attn = jax.nn.softmax(dots1, axis=-1) + eps
    attn = attn / attn.sum(-1, keepdims=True)
    attn = topk_mask(attn, k_n)
    updates = attn @ v

    ecat = jnp.concatenate([e, updates], axis=-1)
    edges_new = relu(ecat @ w1.T + b1) @ w2.T + b2

    q2 = xn @ wq.T + bq
    k2 = relu(edges_new @ wk.T + bk)
    dots2 = (q2 @ k2.T) * scale
    attn_v = jax.nn.softmax(dots2, axis=-1)
    H = topk_mask(attn_v, k_e)
    return edges_new, H, dots2


if __name__ == "__main__":
    # Small shapes consistent with the module defaults:
    # f_dim=32, num_edges=12, n=16 nodes, hidden=max(32,128)=128, k_n=k_e=10.
    N, D = 16, 32
    NS = 12
    HIDDEN = 128
    K_N, K_E = 10, 10

    key = jax.random.PRNGKey(0)
    ks = jax.random.split(key, 14)
    u = lambda kk, shape, b: jax.random.uniform(kk, shape, jnp.float32, -b, b)
    bd = 1.0 / math.sqrt(D)
    bd2 = 1.0 / math.sqrt(2 * D)
    bdh = 1.0 / math.sqrt(HIDDEN)
    xav = math.sqrt(6.0 / (1 + D))       # xavier_uniform_ bound for (1, D)

    inputs = jax.random.normal(ks[0], (N, D), jnp.float32)
    edges_mu = jax.random.normal(ks[1], (1, D), jnp.float32)
    edges_logsigma = u(ks[2], (1, D), xav)
    noise = jax.random.normal(ks[3], (NS, D), jnp.float32)

    wq = u(ks[4], (D, D), bd);   bq = u(ks[5], (D,), bd)
    wk = u(ks[6], (D, D), bd);   bk = u(ks[7], (D,), bd)
    wv = u(ks[8], (D, D), bd);   bv = u(ks[9], (D,), bd)
    w1 = u(ks[10], (HIDDEN, 2 * D), bd2); b1 = u(ks[11], (HIDDEN,), bd2)
    w2 = u(ks[12], (D, HIDDEN), bdh);     b2 = u(ks[13], (D,), bdh)

    # LayerNorm affine params at PyTorch init (weight=1, bias=0).
    g_in = jnp.ones((D,), jnp.float32);  beta_in = jnp.zeros((D,), jnp.float32)
    g_e = jnp.ones((D,), jnp.float32);   beta_e = jnp.zeros((D,), jnp.float32)

    outs = h_constructor_forward(inputs, edges_mu, edges_logsigma, noise,
                                 wq, bq, wk, bk, wv, bv, w1, b1, w2, b2,
                                 g_in, beta_in, g_e, beta_e,
                                 k_n=K_N, k_e=K_E)
    edges_o, H_o, dots_o = jax.block_until_ready(outs)

    edges_r, H_r, dots_r = _reference(inputs, edges_mu, edges_logsigma, noise,
                                      wq, bq, wk, bk, wv, bv, w1, b1, w2, b2,
                                      g_in, beta_in, g_e, beta_e,
                                      k_n=K_N, k_e=K_E)

    assert edges_o.shape == (NS, D)
    assert H_o.shape == (N, NS)
    assert dots_o.shape == (N, NS)
    assert jnp.allclose(edges_o, edges_r, atol=5e-4, rtol=5e-4), "edges mismatch"
    assert jnp.allclose(dots_o, dots_r, atol=5e-4, rtol=5e-4), "dots mismatch"
    assert jnp.allclose(H_o, H_r, atol=5e-3, rtol=5e-3), "H mismatch"

    print("KERNEL_OK")
</pallas_src>

<mosaic_0001>
module attributes {stable_mosaic.version = 11 : i64} {
  func.func @kernel(%arg0: memref<16x32xf32, #tpu.memory_space<vmem>>, %arg1: memref<12x32xf32, #tpu.memory_space<vmem>>, %arg2: memref<9x32xf32, #tpu.memory_space<vmem>>, %arg3: memref<2x128xf32, #tpu.memory_space<vmem>>, %arg4: memref<32x96xf32, #tpu.memory_space<vmem>>, %arg5: memref<32x32xf32, #tpu.memory_space<vmem>>, %arg6: memref<32x32xf32, #tpu.memory_space<vmem>>, %arg7: memref<32x128xf32, #tpu.memory_space<vmem>>, %arg8: memref<32x128xf32, #tpu.memory_space<vmem>>, %arg9: memref<128x32xf32, #tpu.memory_space<vmem>>, %arg10: memref<12x32xf32, #tpu.memory_space<vmem>>, %arg11: memref<16x12xf32, #tpu.memory_space<vmem>>, %arg12: memref<16x12xf32, #tpu.memory_space<vmem>>) attributes {dimension_semantics = [], scalar_prefetch = 0 : i64, scratch_operands = 0 : i64, tpu.core_type = #tpu.core_type<tc>} {
    %c0 = arith.constant 0 : index
    %c0_0 = arith.constant 0 : index
    %0 = vector.load %arg2[%c0, %c0_0] : memref<9x32xf32, #tpu.memory_space<vmem>>, vector<1x32xf32>
    %c1 = arith.constant 1 : index
    %c0_1 = arith.constant 0 : index
    %1 = vector.load %arg2[%c1, %c0_1] : memref<9x32xf32, #tpu.memory_space<vmem>>, vector<1x32xf32>
    %c2 = arith.constant 2 : index
    %c0_2 = arith.constant 0 : index
    %2 = vector.load %arg2[%c2, %c0_2] : memref<9x32xf32, #tpu.memory_space<vmem>>, vector<1x32xf32>
    %c3 = arith.constant 3 : index
    %c0_3 = arith.constant 0 : index
    %3 = vector.load %arg2[%c3, %c0_3] : memref<9x32xf32, #tpu.memory_space<vmem>>, vector<1x32xf32>
    %c4 = arith.constant 4 : index
    %c0_4 = arith.constant 0 : index
    %4 = vector.load %arg2[%c4, %c0_4] : memref<9x32xf32, #tpu.memory_space<vmem>>, vector<1x32xf32>
    %c5 = arith.constant 5 : index
    %c0_5 = arith.constant 0 : index
    %5 = vector.load %arg2[%c5, %c0_5] : memref<9x32xf32, #tpu.memory_space<vmem>>, vector<1x32xf32>
    %c6 = arith.constant 6 : index
    %c0_6 = arith.constant 0 : index
    %6 = vector.load %arg2[%c6, %c0_6] : memref<9x32xf32, #tpu.memory_space<vmem>>, vector<1x32xf32>
    %c7 = arith.constant 7 : index
    %c0_7 = arith.constant 0 : index
    %7 = vector.load %arg2[%c7, %c0_7] : memref<9x32xf32, #tpu.memory_space<vmem>>, vector<1x32xf32>
    %c8 = arith.constant 8 : index
    %c0_8 = arith.constant 0 : index
    %8 = vector.load %arg2[%c8, %c0_8] : memref<9x32xf32, #tpu.memory_space<vmem>>, vector<1x32xf32>
    %9 = math.exp %8 : vector<1x32xf32>
    %c0_9 = arith.constant 0 : index
    %c0_10 = arith.constant 0 : index
    %10 = vector.load %arg1[%c0_9, %c0_10] : memref<12x32xf32, #tpu.memory_space<vmem>>, vector<12x32xf32>
    %11 = vector.broadcast %9 : vector<1x32xf32> to vector<12x32xf32>
    %12 = arith.mulf %11, %10 : vector<12x32xf32>
    %13 = vector.broadcast %7 : vector<1x32xf32> to vector<12x32xf32>
    %14 = arith.addf %13, %12 : vector<12x32xf32>
    %c0_11 = arith.constant 0 : index
    %c0_12 = arith.constant 0 : index
    %15 = vector.load %arg0[%c0_11, %c0_12] : memref<16x32xf32, #tpu.memory_space<vmem>>, vector<16x32xf32>
    %cst = arith.constant dense<0.000000e+00> : vector<16xf32>
    %16 = vector.multi_reduction <add>, %15, %cst [1] : vector<16x32xf32> to vector<16xf32>
    %17 = vector.shape_cast %16 : vector<16xf32> to vector<16x1xf32>
    %cst_13 = arith.constant 3.200000e+01 : f32
    %18 = vector.broadcast %cst_13 : f32 to vector<16x1xf32>
    %19 = arith.divf %17, %18 : vector<16x1xf32>
    %20 = vector.broadcast %19 : vector<16x1xf32> to vector<16x32xf32>
    %21 = arith.subf %15, %20 : vector<16x32xf32>
    %22 = arith.mulf %21, %21 : vector<16x32xf32>
    %cst_14 = arith.constant dense<0.000000e+00> : vector<16xf32>
    %23 = vector.multi_reduction <add>, %22, %cst_14 [1] : vector<16x32xf32> to vector<16xf32>
    %24 = vector.shape_cast %23 : vector<16xf32> to vector<16x1xf32>
    %cst_15 = arith.constant 3.200000e+01 : f32
    %25 = vector.broadcast %cst_15 : f32 to vector<16x1xf32>
    %26 = arith.divf %24, %25 : vector<16x1xf32>
    %cst_16 = arith.constant 9.99999974E-6 : f32
    %27 = vector.broadcast %cst_16 : f32 to vector<16x1xf32>
    %28 = arith.addf %26, %27 : vector<16x1xf32>
    %29 = math.rsqrt %28 : vector<16x1xf32>
    %30 = vector.broadcast %29 : vector<16x1xf32> to vector<16x32xf32>
    %31 = arith.mulf %21, %30 : vector<16x32xf32>
    %32 = vector.broadcast %0 : vector<1x32xf32> to vector<16x32xf32>
    %33 = arith.mulf %31, %32 : vector<16x32xf32>
    %34 = vector.broadcast %1 : vector<1x32xf32> to vector<16x32xf32>
    %35 = arith.addf %33, %34 : vector<16x32xf32>
    %c0_17 = arith.constant 0 : index
    %c0_18 = arith.constant 0 : index
    %36 = vector.load %arg4[%c0_17, %c0_18] : memref<32x96xf32, #tpu.memory_space<vmem>>, vector<32x96xf32>
    %cst_19 = arith.constant dense<0.000000e+00> : vector<16x96xf32>
    %37 = tpu.matmul %35, %36, %cst_19 {dimension_numbers = #tpu.dot_dimension_numbers<[1], [0], [0], [1], [0, 0, 1, 1], [], []>} : vector<16x32xf32>, vector<32x96xf32>, vector<16x96xf32> -> vector<16x96xf32>
    %c0_20 = arith.constant 0 : index
    %c0_21 = arith.constant 0 : index
    %38 = vector.load %arg3[%c0_20, %c0_21] : memref<2x128xf32, #tpu.memory_space<vmem>>, vector<1x96xf32>
    %39 = vector.broadcast %38 : vector<1x96xf32> to vector<16x96xf32>
    %40 = arith.addf %37, %39 : vector<16x96xf32>
    %41 = vector.extract_strided_slice %40 {offsets = [0, 0], sizes = [16, 32], strides = [1, 1]} : vector<16x96xf32> to vector<16x32xf32>
    %42 = vector.extract_strided_slice %40 {offsets = [0, 32], sizes = [16, 32], strides = [1, 1]} : vector<16x96xf32> to vector<16x32xf32>
    %cst_22 = arith.constant 0.000000e+00 : f32
    %43 = vector.broadcast %cst_22 : f32 to vector<16x32xf32>
    %44 = arith.maximumf %42, %43 : vector<16x32xf32>
    %45 = vector.extract_strided_slice %40 {offsets = [0, 64], sizes = [16, 32], strides = [1, 1]} : vector<16x96xf32> to vector<16x32xf32>
    %cst_23 = arith.constant 0.000000e+00 : f32
    %46 = vector.broadcast %cst_23 : f32 to vector<16x32xf32>
    %47 = arith.maximumf %45, %46 : vector<16x32xf32>
    %c1_24 = arith.constant 1 : index
    %c0_25 = arith.constant 0 : index
    %48 = vector.load %arg3[%c1_24, %c0_25] : memref<2x128xf32, #tpu.memory_space<vmem>>, vector<1x128xf32>
    %cst_26 = arith.constant dense<0.000000e+00> : vector<12xf32>
    %49 = vector.multi_reduction <add>, %14, %cst_26 [1] : vector<12x32xf32> to vector<12xf32>
    %50 = vector.shape_cast %49 : vector<12xf32> to vector<12x1xf32>
    %cst_27 = arith.constant 3.200000e+01 : f32
    %51 = vector.broadcast %cst_27 : f32 to vector<12x1xf32>
    %52 = arith.divf %50, %51 : vector<12x1xf32>
    %53 = vector.broadcast %52 : vector<12x1xf32> to vector<12x32xf32>
    %54 = arith.subf %14, %53 : vector<12x32xf32>
    %55 = arith.mulf %54, %54 : vector<12x32xf32>
    %cst_28 = arith.constant dense<0.000000e+00> : vector<12xf32>
    %56 = vector.multi_reduction <add>, %55, %cst_28 [1] : vector<12x32xf32> to vector<12xf32>
    %57 = vector.shape_cast %56 : vector<12xf32> to vector<12x1xf32>
    %cst_29 = arith.constant 3.200000e+01 : f32
    %58 = vector.broadcast %cst_29 : f32 to vector<12x1xf32>
    %59 = arith.divf %57, %58 : vector<12x1xf32>
    %cst_30 = arith.constant 9.99999974E-6 : f32
    %60 = vector.broadcast %cst_30 : f32 to vector<12x1xf32>
    %61 = arith.addf %59, %60 : vector<12x1xf32>
    %62 = math.rsqrt %61 : vector<12x1xf32>
    %63 = vector.broadcast %62 : vector<12x1xf32> to vector<12x32xf32>
    %64 = arith.mulf %54, %63 : vector<12x32xf32>
    %65 = vector.broadcast %2 : vector<1x32xf32> to vector<12x32xf32>
    %66 = arith.mulf %64, %65 : vector<12x32xf32>
    %67 = vector.broadcast %3 : vector<1x32xf32> to vector<12x32xf32>
    %68 = arith.addf %66, %67 : vector<12x32xf32>
    %c0_31 = arith.constant 0 : index
    %c0_32 = arith.constant 0 : index
    %69 = vector.load %arg5[%c0_31, %c0_32] : memref<32x32xf32, #tpu.memory_space<vmem>>, vector<32x32xf32>
    %cst_33 = arith.constant dense<0.000000e+00> : vector<12x32xf32>
    %70 = tpu.matmul %68, %69, %cst_33 {dimension_numbers = #tpu.dot_dimension_numbers<[1], [0], [0], [1], [0, 0, 1, 1], [], []>} : vector<12x32xf32>, vector<32x32xf32>, vector<12x32xf32> -> vector<12x32xf32>
    %71 = vector.broadcast %4 : vector<1x32xf32> to vector<12x32xf32>
    %72 = arith.addf %70, %71 : vector<12x32xf32>
    %cst_34 = arith.constant 0.000000e+00 : f32
    %73 = vector.broadcast %cst_34 : f32 to vector<12x32xf32>
    %74 = arith.maximumf %72, %73 : vector<12x32xf32>
    %75 = tpu.transpose %44, [1, 0] : vector<16x32xf32> -> vector<32x16xf32>
    %cst_35 = arith.constant dense<0.000000e+00> : vector<12x16xf32>
    %76 = tpu.matmul %74, %75, %cst_35 {dimension_numbers = #tpu.dot_dimension_numbers<[1], [0], [0], [1], [0, 0, 1, 1], [], []>} : vector<12x32xf32>, vector<32x16xf32>, vector<12x16xf32> -> vector<12x16xf32>
    %cst_36 = arith.constant 0.176776692 : f32
    %77 = vector.broadcast %cst_36 : f32 to vector<12x16xf32>
    %78 = arith.mulf %76, %77 : vector<12x16xf32>
    %cst_37 = arith.constant dense<0xFF800000> : vector<12xf32>
    %79 = vector.multi_reduction <maximumf>, %78, %cst_37 [1] : vector<12x16xf32> to vector<12xf32>
    %80 = vector.shape_cast %79 : vector<12xf32> to vector<12x1xf32>
    %81 = vector.broadcast %80 : vector<12x1xf32> to vector<12x16xf32>
    %82 = arith.subf %78, %81 : vector<12x16xf32>
    %83 = math.exp %82 : vector<12x16xf32>
    %cst_38 = arith.constant dense<0.000000e+00> : vector<12xf32>
    %84 = vector.multi_reduction <add>, %83, %cst_38 [1] : vector<12x16xf32> to vector<12xf32>
    %85 = vector.shape_cast %84 : vector<12xf32> to vector<12x1xf32>
    %86 = vector.broadcast %85 : vector<12x1xf32> to vector<12x16xf32>
    %87 = arith.divf %83, %86 : vector<12x16xf32>
    %cst_39 = arith.constant 9.99999993E-9 : f32
    %88 = vector.broadcast %cst_39 : f32 to vector<12x16xf32>
    %89 = arith.addf %87, %88 : vector<12x16xf32>
    %cst_40 = arith.constant dense<0.000000e+00> : vector<12xf32>
    %90 = vector.multi_reduction <add>, %89, %cst_40 [1] : vector<12x16xf32> to vector<12xf32>
    %91 = vector.shape_cast %90 : vector<12xf32> to vector<12x1xf32>
    %92 = vector.broadcast %91 : vector<12x1xf32> to vector<12x16xf32>
    %93 = arith.divf %89, %92 : vector<12x16xf32>
    %cst_41 = arith.constant dense<0x7F800000> : vector<12xf32>
    %94 = vector.multi_reduction <minimumf>, %93, %cst_41 [1] : vector<12x16xf32> to vector<12xf32>
    %95 = vector.shape_cast %94 : vector<12xf32> to vector<12x1xf32>
    %96 = vector.broadcast %95 : vector<12x1xf32> to vector<12x16xf32>
    %97 = arith.cmpf ole, %93, %96 : vector<12x16xf32>
    %cst_42 = arith.constant 1.000000e+30 : f32
    %98 = vector.broadcast %cst_42 : f32 to vector<12x16xf32>
    %99 = arith.select %97, %98, %93 : vector<12x16xi1>, vector<12x16xf32>
    %cst_43 = arith.constant dense<0x7F800000> : vector<12xf32>
    %100 = vector.multi_reduction <minimumf>, %99, %cst_43 [1] : vector<12x16xf32> to vector<12xf32>
    %101 = vector.shape_cast %100 : vector<12xf32> to vector<12x1xf32>
    %102 = vector.broadcast %101 : vector<12x1xf32> to vector<12x16xf32>
    %103 = arith.cmpf ole, %99, %102 : vector<12x16xf32>
    %cst_44 = arith.constant 1.000000e+30 : f32
    %104 = vector.broadcast %cst_44 : f32 to vector<12x16xf32>
    %105 = arith.select %103, %104, %99 : vector<12x16xi1>, vector<12x16xf32>
    %cst_45 = arith.constant dense<0x7F800000> : vector<12xf32>
    %106 = vector.multi_reduction <minimumf>, %105, %cst_45 [1] : vector<12x16xf32> to vector<12xf32>
    %107 = vector.shape_cast %106 : vector<12xf32> to vector<12x1xf32>
    %108 = vector.broadcast %107 : vector<12x1xf32> to vector<12x16xf32>
    %109 = arith.cmpf ole, %105, %108 : vector<12x16xf32>
    %cst_46 = arith.constant 1.000000e+30 : f32
    %110 = vector.broadcast %cst_46 : f32 to vector<12x16xf32>
    %111 = arith.select %109, %110, %105 : vector<12x16xi1>, vector<12x16xf32>
    %cst_47 = arith.constant dense<0x7F800000> : vector<12xf32>
    %112 = vector.multi_reduction <minimumf>, %111, %cst_47 [1] : vector<12x16xf32> to vector<12xf32>
    %113 = vector.shape_cast %112 : vector<12xf32> to vector<12x1xf32>
    %114 = vector.broadcast %113 : vector<12x1xf32> to vector<12x16xf32>
    %115 = arith.cmpf ole, %111, %114 : vector<12x16xf32>
    %cst_48 = arith.constant 1.000000e+30 : f32
    %116 = vector.broadcast %cst_48 : f32 to vector<12x16xf32>
    %117 = arith.select %115, %116, %111 : vector<12x16xi1>, vector<12x16xf32>
    %cst_49 = arith.constant dense<0x7F800000> : vector<12xf32>
    %118 = vector.multi_reduction <minimumf>, %117, %cst_49 [1] : vector<12x16xf32> to vector<12xf32>
    %119 = vector.shape_cast %118 : vector<12xf32> to vector<12x1xf32>
    %120 = vector.broadcast %119 : vector<12x1xf32> to vector<12x16xf32>
    %121 = arith.cmpf ole, %117, %120 : vector<12x16xf32>
    %cst_50 = arith.constant 1.000000e+30 : f32
    %122 = vector.broadcast %cst_50 : f32 to vector<12x16xf32>
    %123 = arith.select %121, %122, %117 : vector<12x16xi1>, vector<12x16xf32>
    %cst_51 = arith.constant dense<0x7F800000> : vector<12xf32>
    %124 = vector.multi_reduction <minimumf>, %123, %cst_51 [1] : vector<12x16xf32> to vector<12xf32>
    %125 = vector.shape_cast %124 : vector<12xf32> to vector<12x1xf32>
    %126 = vector.broadcast %125 : vector<12x1xf32> to vector<12x16xf32>
    %127 = arith.cmpf ogt, %93, %126 : vector<12x16xf32>
    %cst_52 = arith.constant 0.000000e+00 : f32
    %128 = vector.broadcast %cst_52 : f32 to vector<12x16xf32>
    %129 = arith.select %127, %93, %128 : vector<12x16xi1>, vector<12x16xf32>
    %cst_53 = arith.constant dense<0.000000e+00> : vector<12x32xf32>
    %130 = tpu.matmul %129, %47, %cst_53 {dimension_numbers = #tpu.dot_dimension_numbers<[1], [0], [0], [1], [0, 0, 1, 1], [], []>} : vector<12x16xf32>, vector<16x32xf32>, vector<12x32xf32> -> vector<12x32xf32>
    %c0_54 = arith.constant 0 : index
    %c0_55 = arith.constant 0 : index
    %131 = vector.load %arg7[%c0_54, %c0_55] : memref<32x128xf32, #tpu.memory_space<vmem>>, vector<32x128xf32>
    %cst_56 = arith.constant dense<0.000000e+00> : vector<12x128xf32>
    %132 = tpu.matmul %68, %131, %cst_56 {dimension_numbers = #tpu.dot_dimension_numbers<[1], [0], [0], [1], [0, 0, 1, 1], [], []>} : vector<12x32xf32>, vector<32x128xf32>, vector<12x128xf32> -> vector<12x128xf32>
    %c0_57 = arith.constant 0 : index
    %c0_58 = arith.constant 0 : index
    %133 = vector.load %arg8[%c0_57, %c0_58] : memref<32x128xf32, #tpu.memory_space<vmem>>, vector<32x128xf32>
    %cst_59 = arith.constant dense<0.000000e+00> : vector<12x128xf32>
    %134 = tpu.matmul %130, %133, %cst_59 {dimension_numbers = #tpu.dot_dimension_numbers<[1], [0], [0], [1], [0, 0, 1, 1], [], []>} : vector<12x32xf32>, vector<32x128xf32>, vector<12x128xf32> -> vector<12x128xf32>
    %135 = arith.addf %132, %134 : vector<12x128xf32>
    %136 = vector.broadcast %48 : vector<1x128xf32> to vector<12x128xf32>
    %137 = arith.addf %135, %136 : vector<12x128xf32>
    %cst_60 = arith.constant 0.000000e+00 : f32
    %138 = vector.broadcast %cst_60 : f32 to vector<12x128xf32>
    %139 = arith.maximumf %137, %138 : vector<12x128xf32>
    %c0_61 = arith.constant 0 : index
    %c0_62 = arith.constant 0 : index
    %140 = vector.load %arg9[%c0_61, %c0_62] : memref<128x32xf32, #tpu.memory_space<vmem>>, vector<128x32xf32>
    %cst_63 = arith.constant dense<0.000000e+00> : vector<12x32xf32>
    %141 = tpu.matmul %139, %140, %cst_63 {dimension_numbers = #tpu.dot_dimension_numbers<[1], [0], [0], [1], [0, 0, 1, 1], [], []>} : vector<12x128xf32>, vector<128x32xf32>, vector<12x32xf32> -> vector<12x32xf32>
    %142 = vector.broadcast %6 : vector<1x32xf32> to vector<12x32xf32>
    %143 = arith.addf %141, %142 : vector<12x32xf32>
    %c0_64 = arith.constant 0 : index
    %c0_65 = arith.constant 0 : index
    %144 = vector.load %arg6[%c0_64, %c0_65] : memref<32x32xf32, #tpu.memory_space<vmem>>, vector<32x32xf32>
    %cst_66 = arith.constant dense<0.000000e+00> : vector<12x32xf32>
    %145 = tpu.matmul %143, %144, %cst_66 {dimension_numbers = #tpu.dot_dimension_numbers<[1], [0], [0], [1], [0, 0, 1, 1], [], []>} : vector<12x32xf32>, vector<32x32xf32>, vector<12x32xf32> -> vector<12x32xf32>
    %146 = vector.broadcast %5 : vector<1x32xf32> to vector<12x32xf32>
    %147 = arith.addf %145, %146 : vector<12x32xf32>
    %cst_67 = arith.constant 0.000000e+00 : f32
    %148 = vector.broadcast %cst_67 : f32 to vector<12x32xf32>
    %149 = arith.maximumf %147, %148 : vector<12x32xf32>
    %150 = tpu.transpose %149, [1, 0] : vector<12x32xf32> -> vector<32x12xf32>
    %cst_68 = arith.constant dense<0.000000e+00> : vector<16x12xf32>
    %151 = tpu.matmul %41, %150, %cst_68 {dimension_numbers = #tpu.dot_dimension_numbers<[1], [0], [0], [1], [0, 0, 1, 1], [], []>} : vector<16x32xf32>, vector<32x12xf32>, vector<16x12xf32> -> vector<16x12xf32>
    %cst_69 = arith.constant 0.176776692 : f32
    %152 = vector.broadcast %cst_69 : f32 to vector<16x12xf32>
    %153 = arith.mulf %151, %152 : vector<16x12xf32>
    %cst_70 = arith.constant dense<0xFF800000> : vector<16xf32>
    %154 = vector.multi_reduction <maximumf>, %153, %cst_70 [1] : vector<16x12xf32> to vector<16xf32>
    %155 = vector.shape_cast %154 : vector<16xf32> to vector<16x1xf32>
    %156 = vector.broadcast %155 : vector<16x1xf32> to vector<16x12xf32>
    %157 = arith.subf %153, %156 : vector<16x12xf32>
    %158 = math.exp %157 : vector<16x12xf32>
    %cst_71 = arith.constant dense<0.000000e+00> : vector<16xf32>
    %159 = vector.multi_reduction <add>, %158, %cst_71 [1] : vector<16x12xf32> to vector<16xf32>
    %160 = vector.shape_cast %159 : vector<16xf32> to vector<16x1xf32>
    %161 = vector.broadcast %160 : vector<16x1xf32> to vector<16x12xf32>
    %162 = arith.divf %158, %161 : vector<16x12xf32>
    %cst_72 = arith.constant dense<0x7F800000> : vector<16xf32>
    %163 = vector.multi_reduction <minimumf>, %162, %cst_72 [1] : vector<16x12xf32> to vector<16xf32>
    %164 = vector.shape_cast %163 : vector<16xf32> to vector<16x1xf32>
    %165 = vector.broadcast %164 : vector<16x1xf32> to vector<16x12xf32>
    %166 = arith.cmpf ole, %162, %165 : vector<16x12xf32>
    %cst_73 = arith.constant 1.000000e+30 : f32
    %167 = vector.broadcast %cst_73 : f32 to vector<16x12xf32>
    %168 = arith.select %166, %167, %162 : vector<16x12xi1>, vector<16x12xf32>
    %cst_74 = arith.constant dense<0x7F800000> : vector<16xf32>
    %169 = vector.multi_reduction <minimumf>, %168, %cst_74 [1] : vector<16x12xf32> to vector<16xf32>
    %170 = vector.shape_cast %169 : vector<16xf32> to vector<16x1xf32>
    %171 = vector.broadcast %170 : vector<16x1xf32> to vector<16x12xf32>
    %172 = arith.cmpf ogt, %162, %171 : vector<16x12xf32>
    %cst_75 = arith.constant 0.000000e+00 : f32
    %173 = vector.broadcast %cst_75 : f32 to vector<16x12xf32>
    %174 = arith.select %172, %162, %173 : vector<16x12xi1>, vector<16x12xf32>
    %c0_76 = arith.constant 0 : index
    %c0_77 = arith.constant 0 : index
    %175 = vector.load %arg10[%c0_76, %c0_77] : memref<12x32xf32, #tpu.memory_space<vmem>>, vector<12x32xf32>
    tpu.vector_store %arg10[%c0_76, %c0_77], %143 {strides = array<i32>} : memref<12x32xf32, #tpu.memory_space<vmem>>, vector<12x32xf32>,
    %c0_78 = arith.constant 0 : index
    %c0_79 = arith.constant 0 : index
    %176 = vector.load %arg11[%c0_78, %c0_79] : memref<16x12xf32, #tpu.memory_space<vmem>>, vector<16x12xf32>
    tpu.vector_store %arg11[%c0_78, %c0_79], %174 {strides = array<i32>} : memref<16x12xf32, #tpu.memory_space<vmem>>, vector<16x12xf32>,
    %c0_80 = arith.constant 0 : index
    %c0_81 = arith.constant 0 : index
    %177 = vector.load %arg12[%c0_80, %c0_81] : memref<16x12xf32, #tpu.memory_space<vmem>>, vector<16x12xf32>
    tpu.vector_store %arg12[%c0_80, %c0_81], %153 {strides = array<i32>} : memref<16x12xf32, #tpu.memory_space<vmem>>, vector<16x12xf32>,
    return
  }
}

</mosaic_0001>

<llo_original>
// kernel: tpu_custom_call.1
$region0: #{tpu_custom_call.1}
  #allocation0 [shape = 'u32[]', space=smem, size = 0x4, offset = 0x4, fixed_abs, tag = 'smem constant byte address 0x4 - core index']
  #allocation1 [shape = 'u32[144,128]{1,0:T(1,128)}', space=vmem, size = 0x12000, scoped, tag = 'internal scratch']
  %s0 = inlined_call_operand.hbm [shape: f32[16,32], index: 0, kind: input, shape index: {}]
  %s1 = inlined_call_operand.hbm [shape: f32[12,32], index: 1, kind: input, shape index: {}]
  %s2 = inlined_call_operand.hbm [shape: f32[9,32], index: 2, kind: input, shape index: {}]
  %s3 = inlined_call_operand.vmem [shape: f32[2,128], index: 3, kind: input, shape index: {}]
  %s4 = inlined_call_operand.vmem [shape: f32[32,96], index: 4, kind: input, shape index: {}]
  %s5 = inlined_call_operand.vmem [shape: f32[32,32], index: 5, kind: input, shape index: {}]
  %s6 = inlined_call_operand.vmem [shape: f32[32,32], index: 6, kind: input, shape index: {}]
  %s7 = inlined_call_operand.vmem [shape: f32[32,128], index: 7, kind: input, shape index: {}]
  %s8 = inlined_call_operand.vmem [shape: f32[32,128], index: 8, kind: input, shape index: {}]
  %s9 = inlined_call_operand.vmem [shape: f32[128,32], index: 9, kind: input, shape index: {}]
  %s10 = inlined_call_operand.hbm [shape: f32[12,32], index: 10, kind: output, shape index: {0}]
  %s11 = inlined_call_operand.hbm [shape: f32[16,12], index: 11, kind: output, shape index: {1}]
  %s12 = inlined_call_operand.hbm [shape: f32[16,12], index: 12, kind: output, shape index: {2}]
  %13 = xla_tuple %s10, %s11, %s12
  %s14 = sld [smem:[#allocation0]]
  $region78: #{tpu_custom_call.1} parent=0
    _
  %s16 = ssub.s32 1, %s14
  %s17 = scalar_select 0, %s16, %s14
  $region1: #{tpu_custom_call.1} parent=0
    #allocation2 [shape = 'u8[8192]{0}', space=vmem, size = 0x2000, scoped, tag = 'input window, operand 0, single buffered']
    #allocation3 [shape = 's32[1]{0}', space=sflag, size = 0x4, scoped, tag = 'scoped memory for tpu_custom_call.1']
    #allocation4 [shape = 's32[1]{0}', space=sflag, size = 0x4, scoped, tag = 'scoped memory for tpu_custom_call.1']
    #allocation5 [shape = 'u8[8192]{0}', space=vmem, size = 0x2000, scoped, tag = 'input window, operand 1, single buffered']
    #allocation6 [shape = 's32[1]{0}', space=sflag, size = 0x4, scoped, tag = 'scoped memory for tpu_custom_call.1']
    #allocation7 [shape = 'u8[8192]{0}', space=vmem, size = 0x2000, scoped, tag = 'input window, operand 2, single buffered']
    #allocation8 [shape = 'u8[8192]{0}', space=vmem, size = 0x2000, scoped, tag = 'output window, operand 0, single buffered']
    #allocation9 [shape = 'u8[8192]{0}', space=vmem, size = 0x2000, scoped, tag = 'output window, operand 1, single buffered']
    #allocation10 [shape = 's32[1]{0}', space=sflag, size = 0x4, scoped, tag = 'scoped memory for tpu_custom_call.1']
    #allocation11 [shape = 'u8[8192]{0}', space=vmem, size = 0x2000, scoped, tag = 'output window, operand 2, single buffered']
    %18 = vsyncpa [#allocation3], 0
    %19 = vsyncpa [#allocation6], 0
    %20 = vsyncpa [#allocation4], 0
    %21 = vsyncpa [#allocation10], 0
    // Predicated region
    $region2: #{tpu_custom_call.1} parent=1 // pred_check
      _
    $region3: #{tpu_custom_call.1} parent=1 // pred_check_branch
      %23 = sbr.rel (0) target = $region5
    $region4: #{tpu_custom_call.1} parent=1 // pred_region
      %s25 = ssub.s32 256, 256
      %26 = vsyncadd [#allocation3], %s25
      %s27 = sshll.u32 [#allocation2], 4
      %s28 = int_to_ptr.vmem [resolvable:$true] %s27
      %33 = dma.hbm_to_vmem [thread:$0]  %s0, 256, %s28, [#allocation3], 128, 128, 8
    $region5: #{tpu_custom_call.1} parent=1 // pred_fallthru
      _
    // Predicated region
    $region6: #{tpu_custom_call.1} parent=1 // pred_check
      _
    $region7: #{tpu_custom_call.1} parent=1 // pred_check_branch
      %35 = sbr.rel (0) target = $region9
    $region8: #{tpu_custom_call.1} parent=1 // pred_region
      %s37 = ssub.s32 256, 256
      %38 = vsyncadd [#allocation6], %s37
      %s39 = sshll.u32 [#allocation5], 4
      %s40 = int_to_ptr.vmem [resolvable:$true] %s39
      %45 = dma.hbm_to_vmem [thread:$0]  %s1, 256, %s40, [#allocation6], 128, 128, 8
    $region9: #{tpu_custom_call.1} parent=1 // pred_fallthru
      _
    // Predicated region
    $region10: #{tpu_custom_call.1} parent=1 // pred_check
      _
    $region11: #{tpu_custom_call.1} parent=1 // pred_check_branch
      %47 = sbr.rel (0) target = $region13
    $region12: #{tpu_custom_call.1} parent=1 // pred_region
      %s49 = ssub.s32 256, 256
      %50 = vsyncadd [#allocation6], %s49
      %s51 = sshll.u32 [#allocation7], 4
      %s52 = int_to_ptr.vmem [resolvable:$true] %s51
      %57 = dma.hbm_to_vmem [thread:$0]  %s2, 256, %s52, [#allocation6], 128, 128, 8
    $region13: #{tpu_custom_call.1} parent=1 // pred_fallthru
      _
    // Predicated region
    $region14: #{tpu_custom_call.1} parent=1 // pred_check
      _
    $region15: #{tpu_custom_call.1} parent=1 // pred_check_branch
      %59 = sbr.rel (0) target = $region17
    $region16: #{tpu_custom_call.1} parent=1 // pred_region
      _
    $region17: #{tpu_custom_call.1} parent=1 // pred_fallthru
      _
    // Predicated region
    $region18: #{tpu_custom_call.1} parent=1 // pred_check
      _
    $region19: #{tpu_custom_call.1} parent=1 // pred_check_branch
      %61 = sbr.rel (0) target = $region21
    $region20: #{tpu_custom_call.1} parent=1 // pred_region
      _
    $region21: #{tpu_custom_call.1} parent=1 // pred_fallthru
      _
    // Predicated region
    $region22: #{tpu_custom_call.1} parent=1 // pred_check
      _
    $region23: #{tpu_custom_call.1} parent=1 // pred_check_branch
      %63 = sbr.rel (0) target = $region25
    $region24: #{tpu_custom_call.1} parent=1 // pred_region
      _
    $region25: #{tpu_custom_call.1} parent=1 // pred_fallthru
      _
    // Predicated region
    $region26: #{tpu_custom_call.1} parent=1 // pred_check
      _
    $region27: #{tpu_custom_call.1} parent=1 // pred_check_branch
      %65 = sbr.rel (0) target = $region29
    $region28: #{tpu_custom_call.1} parent=1 // pred_region
      _
    $region29: #{tpu_custom_call.1} parent=1 // pred_fallthru
      _
    // Predicated region
    $region30: #{tpu_custom_call.1} parent=1 // pred_check
      _
    $region31: #{tpu_custom_call.1} parent=1 // pred_check_branch
      %67 = sbr.rel (0) target = $region33
    $region32: #{tpu_custom_call.1} parent=1 // pred_region
      _
    $region33: #{tpu_custom_call.1} parent=1 // pred_fallthru
      _
    // Predicated region
    $region34: #{tpu_custom_call.1} parent=1 // pred_check
      _
    $region35: #{tpu_custom_call.1} parent=1 // pred_check_branch
      %69 = sbr.rel (0) target = $region37
    $region36: #{tpu_custom_call.1} parent=1 // pred_region
      _
    $region37: #{tpu_custom_call.1} parent=1 // pred_fallthru
      _
    // Predicated region
    $region38: #{tpu_custom_call.1} parent=1 // pred_check
      _
    $region39: #{tpu_custom_call.1} parent=1 // pred_check_branch
      %71 = sbr.rel (0) target = $region41
    $region40: #{tpu_custom_call.1} parent=1 // pred_region
      _
    $region41: #{tpu_custom_call.1} parent=1 // pred_fallthru
      _
    // Predicated region
    $region42: #{tpu_custom_call.1} parent=1 // pred_check
      _
    $region43: #{tpu_custom_call.1} parent=1 // pred_check_branch
      %73 = sbr.rel (0) target = $region45
    $region44: #{tpu_custom_call.1} parent=1 // pred_region
      %74 = dma.done [#allocation3], 256
    $region45: #{tpu_custom_call.1} parent=1 // pred_fallthru
      _
    // Predicated region
    $region46: #{tpu_custom_call.1} parent=1 // pred_check
      _
    $region47: #{tpu_custom_call.1} parent=1 // pred_check_branch
      %76 = sbr.rel (0) target = $region49
    $region48: #{tpu_custom_call.1} parent=1 // pred_region
      %77 = dma.done [#allocation6], 256
    $region49: #{tpu_custom_call.1} parent=1 // pred_fallthru
      _
    // Predicated region
    $region50: #{tpu_custom_call.1} parent=1 // pred_check
      _
    $region51: #{tpu_custom_call.1} parent=1 // pred_check_branch
      %79 = sbr.rel (0) target = $region53
    $region52: #{tpu_custom_call.1} parent=1 // pred_region
      %80 = dma.done [#allocation6], 256
    $region53: #{tpu_custom_call.1} parent=1 // pred_fallthru
      _
    %v81 = vld [vmem:[#allocation7] sm:$0x1]
    %v82 = vld [vmem:[#allocation7 + $0x1] sm:$0x1]
    %v83 = vld [vmem:[#allocation7 + $0x2] sm:$0x1]
    %v84 = vld [vmem:[#allocation7 + $0x3] sm:$0x1]
    %v85 = vld [vmem:[#allocation7 + $0x4] sm:$0x1]
    %v86 = vld [vmem:[#allocation7 + $0x5] sm:$0x1]
    %v87 = vld [vmem:[#allocation7 + $0x6] sm:$0x1]
    %v88 = vld [vmem:[#allocation7 + $0x7] sm:$0x1]
    %v89 = vld [vmem:[#allocation7 + $0x8] sm:$0x1]
    %v90 = vmul.f32 %v89, 1.442695
    %v91 = vpow.pop %v90
    %v92 = vld [vmem:[#allocation5] sm:$0xff]
    %v93 = vld [vmem:[#allocation5 + $0x8] sm:$0xf]
    %v94 = vlaneseq
    %v95 = vshrl.u32 %v94, 7
    %v96 = vsub.s32 0, %v95
    %v97 = vrot.slane %v91, %v96
    %v98 = vmul.f32 %v97, %v92
    %v99 = vmul.f32 %v97, %v93
    %v100 = vlaneseq
    %v101 = vshrl.u32 %v100, 7
    %v102 = vsub.s32 0, %v101
    %v103 = vrot.slane %v88, %v102
    %v104 = vadd.f32 %v103, %v98
    %v105 = vadd.f32 %v103, %v99
    %v106 = vld [vmem:[#allocation2] sm:$0xff]
    %v107 = vld [vmem:[#allocation2 + $0x8] sm:$0xff]
    %vm108 = vcmask 261120
    %v109 = vsel %vm108, %v106, 0.0
    %110 = vadd.xlane.f32.xlu0 %v109
    %v111 = vpop.xlane.xlu0 %110
    %v112 = vsel %vm108, %v107, 0.0
    %113 = vadd.xlane.f32.xlu0 %v112
    %v114 = vpop.xlane.xlu0 %113
    %v115 = vrcp.pop 32.0
    %v116 = vmul.f32 %v111, %v115
    %v117 = vmul.f32 %v114, %v115
    %v118 = vsub.f32 %v106, %v116
    %v119 = vsub.f32 %v107, %v117
    %v120 = vmul.f32 %v118, %v118
    %v121 = vmul.f32 %v119, %v119
    %v122 = vsel %vm108, %v120, 0.0
    %123 = vadd.xlane.f32.xlu0 %v122
    %v124 = vpop.xlane.xlu0 %123
    %v125 = vsel %vm108, %v121, 0.0
    %126 = vadd.xlane.f32.xlu0 %v125
    %v127 = vpop.xlane.xlu0 %126
    %v128 = vmul.f32 %v124, %v115
    %v129 = vmul.f32 %v127, %v115
    %v130 = vadd.f32 %v128, 1e-05
    %v131 = vadd.f32 %v129, 1e-05
    %v132 = vrsqrt.pop %v130
    %v133 = vrsqrt.pop %v131
    %v134 = vmul.f32 %v118, %v132
    %v135 = vmul.f32 %v119, %v133
    %v136 = vlaneseq
    %v137 = vshrl.u32 %v136, 7
    %v138 = vsub.s32 0, %v137
    %v139 = vrot.slane %v81, %v138
    %v140 = vmul.f32 %v134, %v139
    %v141 = vmul.f32 %v135, %v139
    %v142 = vlaneseq
    %v143 = vshrl.u32 %v142, 7
    %v144 = vsub.s32 0, %v143
    %v145 = vrot.slane %v82, %v144
    %v146 = vadd.f32 %v140, %v145
    %v147 = vadd.f32 %v141, %v145
    %v148 = vld [vmem:[%s4] sm:$0xff]
    %v149 = vld [vmem:[%s4 + $0x8] sm:$0xff]
    %v150 = vld [vmem:[%s4 + $0x10] sm:$0xff]
    %v151 = vld [vmem:[%s4 + $0x18] sm:$0xff]
    %v152 = vld [vmem:[%s3] sm:$0x1]
    %v153 = vlaneseq
    %v154 = vshrl.u32 %v153, 7
    %v155 = vsub.s32 0, %v154
    %v156 = vrot.slane %v152, %v155
    %v158 = vsel %vm108, %v146, 0
    %v161 = vsel %vm108, %v147, 0
    %163 = vmatprep.subr.mxu0 0.0
    %164 = vmatpush1.msra.mxu0 0.0
    %165 = vmatprep.subr.mxu0 0.0
    %166 = vmatpush1.msra.mxu0 0.0
    %167 = vmatprep.subr.mxu0 0.0
    %168 = vmatpush1.msra.mxu0 0.0
    %169 = vmatprep.subr.mxu0 0.0
    %170 = vmatpush1.msra.mxu0 0.0
    %171 = vmatprep.subr.mxu0 0.0
    %172 = vmatpush1.msra.mxu0 0.0
    %173 = vmatprep.subr.mxu0 0.0
    %174 = vmatpush1.msra.mxu0 0.0
    %175 = vmatprep.subr.mxu0 0.0
    %176 = vmatpush1.msra.mxu0 0.0
    %177 = vmatprep.subr.mxu0 0.0
    %178 = vmatpush1.msra.mxu0 0.0
    %179 = vmatprep.subr.mxu0 0.0
    %180 = vmatpush1.msra.mxu0 0.0
    %181 = vmatprep.subr.mxu0 0.0
    %182 = vmatpush1.msra.mxu0 0.0
    %183 = vmatprep.subr.mxu0 0.0
    %184 = vmatpush1.msra.mxu0 0.0
    %185 = vmatprep.subr.mxu0 0.0
    %186 = vmatpush1.msra.mxu0 0.0
    %187 = vmatprep.subr.mxu0 0.0
    %188 = vmatpush1.msra.mxu0 %v151
    %189 = vmatprep.subr.mxu0 0.0
    %190 = vmatpush1.msra.mxu0 %v150
    %191 = vmatprep.subr.mxu0 0.0
    %192 = vmatpush1.msra.mxu0 %v149
    %193 = vmatprep.subr.mxu0 0.0
    %194 = vmatpush1.msra.mxu0 %v148
    %195 = vmatprep.subr.mxu0 0.0
    %196 = vmatpush2.msra.mxu0 0.0
    %197 = vmatprep.subr.mxu0 0.0
    %198 = vmatpush2.msra.mxu0 0.0
    %199 = vmatprep.subr.mxu0 0.0
    %200 = vmatpush2.msra.mxu0 0.0
    %201 = vmatprep.subr.mxu0 0.0
    %202 = vmatpush2.msra.mxu0 0.0
    %203 = vmatprep.subr.mxu0 0.0
    %204 = vmatpush2.msra.mxu0 0.0
    %205 = vmatprep.subr.mxu0 0.0
    %206 = vmatpush2.msra.mxu0 0.0
    %207 = vmatprep.subr.mxu0 0.0
    %208 = vmatpush2.msra.mxu0 0.0
    %209 = vmatprep.subr.mxu0 0.0
    %210 = vmatpush2.msra.mxu0 0.0
    %211 = vmatprep.subr.mxu0 0.0
    %212 = vmatpush2.msra.mxu0 0.0
    %213 = vmatprep.subr.mxu0 0.0
    %214 = vmatpush2.msra.mxu0 0.0
    %215 = vmatprep.subr.mxu0 0.0
    %216 = vmatpush2.msra.mxu0 0.0
    %217 = vmatprep.subr.mxu0 0.0
    %218 = vmatpush2.msra.mxu0 0.0
    %219 = vmatprep.subr.mxu0 0.0
    %220 = vmatpush2.msra.mxu0 0.0
    %221 = vmatprep.subr.mxu0 0.0
    %222 = vmatpush2.msra.mxu0 0.0
    %223 = vmatprep.subr.mxu0 0.0
    %224 = vmatpush2.msra.mxu0 0.0
    %225 = vmatprep.subr.mxu0 0.0
    %226 = vmatpush2.msra.mxu0 0.0
    %227 = vmatprep.mubr.f32.mxu0 0.0
    %228 = vmatmul.mubr.f32.gmra.mxu0 %v158
    %v229 = vpop.f32.mrf.mxu0
    %v230 = vadd.f32 %v156, %v229
    %v231 = vpop.f32.mrf.mxu0
    %232 = vmatprep.mubr.f32.mxu0 0.0
    %233 = vmatmul.mubr.f32.gmra.mxu0 %v161
    %v234 = vpop.f32.mrf.mxu0
    %v235 = vadd.f32 %v156, %v234
    %v236 = vpop.f32.mrf.mxu0
    %237 = vdwg.mxu0
    %v238 = vmax.f32 %v230, 0.0
    %v239 = vmax.f32 %v235, 0.0
    %v240 = vld [vmem:[%s3 + $0x1] sm:$0x1]
    %v241 = vsel %vm108, %v104, 0.0
    %242 = vadd.xlane.f32.xlu0 %v241
    %v243 = vpop.xlane.xlu0 %242
    %vm244 = vcmask 257024
    %v245 = vsel %vm244, %v105, 0.0
    %246 = vadd.xlane.f32.xlu0 %v245
    %v247 = vpop.xlane.xlu0 %246
    %v248 = vmul.f32 %v243, %v115
    %v249 = vmul.f32 %v247, %v115
    %v250 = vsub.f32 %v104, %v248
    %v251 = vsub.f32 %v105, %v249
    %v252 = vmul.f32 %v250, %v250
    %v253 = vmul.f32 %v251, %v251
    %v254 = vsel %vm108, %v252, 0.0
    %255 = vadd.xlane.f32.xlu0 %v254
    %v256 = vpop.xlane.xlu0 %255
    %v257 = vsel %vm244, %v253, 0.0
    %258 = vadd.xlane.f32.xlu0 %v257
    %v259 = vpop.xlane.xlu0 %258
    %v260 = vmul.f32 %v256, %v115
    %v261 = vmul.f32 %v259, %v115
    %v262 = vadd.f32 %v260, 1e-05
    %v263 = vadd.f32 %v261, 1e-05
    %v264 = vrsqrt.pop %v262
    %v265 = vrsqrt.pop %v263
    %v266 = vmul.f32 %v250, %v264
    %v267 = vmul.f32 %v251, %v265
    %v268 = vlaneseq
    %v269 = vshrl.u32 %v268, 7
    %v270 = vsub.s32 0, %v269
    %v271 = vrot.slane %v83, %v270
    %v272 = vmul.f32 %v266, %v271
    %v273 = vmul.f32 %v267, %v271
    %v274 = vlaneseq
    %v275 = vshrl.u32 %v274, 7
    %v276 = vsub.s32 0, %v275
    %v277 = vrot.slane %v84, %v276
    %v278 = vadd.f32 %v272, %v277
    %v279 = vadd.f32 %v273, %v277
    %v280 = vld [vmem:[%s5] sm:$0xff]
    %v281 = vld [vmem:[%s5 + $0x8] sm:$0xff]
    %v282 = vld [vmem:[%s5 + $0x10] sm:$0xff]
    %v283 = vld [vmem:[%s5 + $0x18] sm:$0xff]
    %v284 = vlaneseq
    %v285 = vshrl.u32 %v284, 7
    %v286 = vsub.s32 0, %v285
    %v287 = vrot.slane %v85, %v286
    %v289 = vsel %vm108, %v278, 0
    %v292 = vsel %vm108, %v279, 0
    %294 = vmatprep.subr.mxu0 0.0
    %295 = vmatpush1.msra.mxu0 0.0
    %296 = vmatprep.subr.mxu0 0.0
    %297 = vmatpush1.msra.mxu0 0.0
    %298 = vmatprep.subr.mxu0 0.0
    %299 = vmatpush1.msra.mxu0 0.0
    %300 = vmatprep.subr.mxu0 0.0
    %301 = vmatpush1.msra.mxu0 0.0
    %302 = vmatprep.subr.mxu0 0.0
    %303 = vmatpush1.msra.mxu0 0.0
    %304 = vmatprep.subr.mxu0 0.0
    %305 = vmatpush1.msra.mxu0 0.0
    %306 = vmatprep.subr.mxu0 0.0
    %307 = vmatpush1.msra.mxu0 0.0
    %308 = vmatprep.subr.mxu0 0.0
    %309 = vmatpush1.msra.mxu0 0.0
    %310 = vmatprep.subr.mxu0 0.0
    %311 = vmatpush1.msra.mxu0 0.0
    %312 = vmatprep.subr.mxu0 0.0
    %313 = vmatpush1.msra.mxu0 0.0
    %314 = vmatprep.subr.mxu0 0.0
    %315 = vmatpush1.msra.mxu0 0.0
    %316 = vmatprep.subr.mxu0 0.0
    %317 = vmatpush1.msra.mxu0 0.0
    %318 = vmatprep.subr.mxu0 0.0
    %319 = vmatpush1.msra.mxu0 %v283
    %320 = vmatprep.subr.mxu0 0.0
    %321 = vmatpush1.msra.mxu0 %v282
    %322 = vmatprep.subr.mxu0 0.0
    %323 = vmatpush1.msra.mxu0 %v281
    %324 = vmatprep.subr.mxu0 0.0
    %325 = vmatpush1.msra.mxu0 %v280
    %326 = vmatprep.subr.mxu0 0.0
    %327 = vmatpush2.msra.mxu0 0.0
    %328 = vmatprep.subr.mxu0 0.0
    %329 = vmatpush2.msra.mxu0 0.0
    %330 = vmatprep.subr.mxu0 0.0
    %331 = vmatpush2.msra.mxu0 0.0
    %332 = vmatprep.subr.mxu0 0.0
    %333 = vmatpush2.msra.mxu0 0.0
    %334 = vmatprep.subr.mxu0 0.0
    %335 = vmatpush2.msra.mxu0 0.0
    %336 = vmatprep.subr.mxu0 0.0
    %337 = vmatpush2.msra.mxu0 0.0
    %338 = vmatprep.subr.mxu0 0.0
    %339 = vmatpush2.msra.mxu0 0.0
    %340 = vmatprep.subr.mxu0 0.0
    %341 = vmatpush2.msra.mxu0 0.0
    %342 = vmatprep.subr.mxu0 0.0
    %343 = vmatpush2.msra.mxu0 0.0
    %344 = vmatprep.subr.mxu0 0.0
    %345 = vmatpush2.msra.mxu0 0.0
    %346 = vmatprep.subr.mxu0 0.0
    %347 = vmatpush2.msra.mxu0 0.0
    %348 = vmatprep.subr.mxu0 0.0
    %349 = vmatpush2.msra.mxu0 0.0
    %350 = vmatprep.subr.mxu0 0.0
    %351 = vmatpush2.msra.mxu0 0.0
    %352 = vmatprep.subr.mxu0 0.0
    %353 = vmatpush2.msra.mxu0 0.0
    %354 = vmatprep.subr.mxu0 0.0
    %355 = vmatpush2.msra.mxu0 0.0
    %356 = vmatprep.subr.mxu0 0.0
    %357 = vmatpush2.msra.mxu0 0.0
    %358 = vmatprep.mubr.f32.mxu0 0.0
    %359 = vmatmul.mubr.f32.gmra.mxu0 %v289
    %v360 = vpop.f32.mrf.mxu0
    %v361 = vadd.f32 %v287, %v360
    %v362 = vpop.f32.mrf.mxu0
    %363 = vmatprep.mubr.f32.mxu0 0.0
    %364 = vmatmul.mubr.f32.gmra.mxu0 %v292
    %v365 = vpop.f32.mrf.mxu0
    %v366 = vadd.f32 %v287, %v365
    %v367 = vpop.f32.mrf.mxu0
    %368 = vdwg.mxu0
    %v369 = vmax.f32 %v361, 0.0
    %v370 = vmax.f32 %v366, 0.0
    %373 = vrot.lane.b32.xlu0 %v238, 96
    %v374 = vpop.permute.xlu0 %373
    %375 = vrot.lane.b32.xlu0 %v239, 96
    %v376 = vpop.permute.xlu0 %375
    %v378 = vsel %vm108, %v369, 0
    %v381 = vsel %vm108, %v370, 0
    %v383 = vsel %vm108, %v374, 0
    %v385 = vsel %vm108, %v376, 0
    %387 = vmatprep.subr.mxu0 0.0
    %388 = vmatpush1.xpose.msra.mxu0 0.0
    %389 = vmatprep.subr.mxu0 0.0
    %390 = vmatpush1.xpose.msra.mxu0 0.0
    %391 = vmatprep.subr.mxu0 0.0
    %392 = vmatpush1.xpose.msra.mxu0 0.0
    %393 = vmatprep.subr.mxu0 0.0
    %394 = vmatpush1.xpose.msra.mxu0 0.0
    %395 = vmatprep.subr.mxu0 0.0
    %396 = vmatpush1.xpose.msra.mxu0 0.0
    %397 = vmatprep.subr.mxu0 0.0
    %398 = vmatpush1.xpose.msra.mxu0 0.0
    %399 = vmatprep.subr.mxu0 0.0
    %400 = vmatpush1.xpose.msra.mxu0 0.0
    %401 = vmatprep.subr.mxu0 0.0
    %402 = vmatpush1.xpose.msra.mxu0 0.0
    %403 = vmatprep.subr.mxu0 0.0
    %404 = vmatpush1.xpose.msra.mxu0 0.0
    %405 = vmatprep.subr.mxu0 0.0
    %406 = vmatpush1.xpose.msra.mxu0 0.0
    %407 = vmatprep.subr.mxu0 0.0
    %408 = vmatpush1.xpose.msra.mxu0 0.0
    %409 = vmatprep.subr.mxu0 0.0
    %410 = vmatpush1.xpose.msra.mxu0 0.0
    %411 = vmatprep.subr.mxu0 0.0
    %412 = vmatpush1.xpose.msra.mxu0 0.0
    %413 = vmatprep.subr.mxu0 0.0
    %414 = vmatpush1.xpose.msra.mxu0 0.0
    %415 = vmatprep.subr.mxu0 0.0
    %416 = vmatpush1.xpose.msra.mxu0 %v385
    %417 = vmatprep.subr.mxu0 0.0
    %418 = vmatpush1.xpose.msra.mxu0 %v383
    %419 = vmatprep.subr.mxu0 0.0
    %420 = vmatpush2.xpose.msra.mxu0 0.0
    %421 = vmatprep.subr.mxu0 0.0
    %422 = vmatpush2.xpose.msra.mxu0 0.0
    %423 = vmatprep.subr.mxu0 0.0
    %424 = vmatpush2.xpose.msra.mxu0 0.0
    %425 = vmatprep.subr.mxu0 0.0
    %426 = vmatpush2.xpose.msra.mxu0 0.0
    %427 = vmatprep.subr.mxu0 0.0
    %428 = vmatpush2.xpose.msra.mxu0 0.0
    %429 = vmatprep.subr.mxu0 0.0
    %430 = vmatpush2.xpose.msra.mxu0 0.0
    %431 = vmatprep.subr.mxu0 0.0
    %432 = vmatpush2.xpose.msra.mxu0 0.0
    %433 = vmatprep.subr.mxu0 0.0
    %434 = vmatpush2.xpose.msra.mxu0 0.0
    %435 = vmatprep.subr.mxu0 0.0
    %436 = vmatpush2.xpose.msra.mxu0 0.0
    %437 = vmatprep.subr.mxu0 0.0
    %438 = vmatpush2.xpose.msra.mxu0 0.0
    %439 = vmatprep.subr.mxu0 0.0
    %440 = vmatpush2.xpose.msra.mxu0 0.0
    %441 = vmatprep.subr.mxu0 0.0
    %442 = vmatpush2.xpose.msra.mxu0 0.0
    %443 = vmatprep.subr.mxu0 0.0
    %444 = vmatpush2.xpose.msra.mxu0 0.0
    %445 = vmatprep.subr.mxu0 0.0
    %446 = vmatpush2.xpose.msra.mxu0 0.0
    %447 = vmatprep.subr.mxu0 0.0
    %448 = vmatpush2.xpose.msra.mxu0 0.0
    %449 = vmatprep.subr.mxu0 0.0
    %450 = vmatpush2.xpose.msra.mxu0 0.0
    %451 = vmatprep.mubr.f32.mxu0 0.0
    %452 = vmatmul.mubr.f32.gmra.mxu0 %v378
    %v453 = vpop.f32.mrf.mxu0
    %v454 = vadd.f32 0.0, %v453
    %v455 = vpop.f32.mrf.mxu0
    %456 = vmatprep.mubr.f32.mxu0 0.0
    %457 = vmatmul.mubr.f32.gmra.mxu0 %v381
    %v458 = vpop.f32.mrf.mxu0
    %v459 = vadd.f32 0.0, %v458
    %v460 = vpop.f32.mrf.mxu0
    %461 = vdwg.mxu0
    %v462 = vmul.f32 %v454, 0.17677669
    %v463 = vmul.f32 %v459, 0.17677669
    %vm464 = vcmask 130048
    %v465 = vsel %vm464, %v462, -inf
    %466 = vmax.xlane.f32.xlu0 %v465
    %v467 = vpop.xlane.xlu0 %466
    %vm468 = vcmask 125952
    %v469 = vsel %vm468, %v463, -inf
    %470 = vmax.xlane.f32.xlu0 %v469
    %v471 = vpop.xlane.xlu0 %470
    %v472 = vsub.f32 %v462, %v467
    %v473 = vsub.f32 %v463, %v471
    %v474 = vmul.f32 %v472, 1.442695
    %v475 = vpow.pop %v474
    %v476 = vmul.f32 %v473, 1.442695
    %v477 = vpow.pop %v476
    %v478 = vsel %vm464, %v475, 0.0
    %479 = vadd.xlane.f32.xlu0 %v478
    %v480 = vpop.xlane.xlu0 %479
    %v481 = vsel %vm468, %v477, 0.0
    %482 = vadd.xlane.f32.xlu0 %v481
    %v483 = vpop.xlane.xlu0 %482
    %v484 = vrcp.pop %v480
    %v485 = vmul.f32 %v475, %v484
    %v486 = vrcp.pop %v483
    %v487 = vmul.f32 %v477, %v486
    %v488 = vadd.f32 %v485, 1e-08
    %v489 = vadd.f32 %v487, 1e-08
    %v490 = vsel %vm464, %v488, 0.0
    %491 = vadd.xlane.f32.xlu0 %v490
    %v492 = vpop.xlane.xlu0 %491
    %v493 = vsel %vm468, %v489, 0.0
    %494 = vadd.xlane.f32.xlu0 %v493
    %v495 = vpop.xlane.xlu0 %494
    %v496 = vrcp.pop %v492
    %v497 = vmul.f32 %v488, %v496
    %v498 = vrcp.pop %v495
    %v499 = vmul.f32 %v489, %v498
    %v500 = vsel %vm464, %v497, inf
    %501 = vmin.xlane.f32.xlu0 %v500
    %v502 = vpop.xlane.xlu0 %501
    %v503 = vsel %vm468, %v499, inf
    %504 = vmin.xlane.f32.xlu0 %v503
    %v505 = vpop.xlane.xlu0 %504
    %vm506 = vcmp.le.f32.partialorder %v497, %v502
    %vm507 = vcmp.le.f32.partialorder %v499, %v505
    %v508 = vsel %vm506, 1e+30, %v497
    %v509 = vsel %vm507, 1e+30, %v499
    %v510 = vsel %vm464, %v508, inf
    %511 = vmin.xlane.f32.xlu0 %v510
    %v512 = vpop.xlane.xlu0 %511
    %v513 = vsel %vm468, %v509, inf
    %514 = vmin.xlane.f32.xlu0 %v513
    %v515 = vpop.xlane.xlu0 %514
    %vm516 = vcmp.le.f32.partialorder %v508, %v512
    %vm517 = vcmp.le.f32.partialorder %v509, %v515
    %v518 = vsel %vm516, 1e+30, %v508
    %v519 = vsel %vm517, 1e+30, %v509
    %v520 = vsel %vm464, %v518, inf
    %521 = vmin.xlane.f32.xlu0 %v520
    %v522 = vpop.xlane.xlu0 %521
    %v523 = vsel %vm468, %v519, inf
    %524 = vmin.xlane.f32.xlu0 %v523
    %v525 = vpop.xlane.xlu0 %524
    %vm526 = vcmp.le.f32.partialorder %v518, %v522
    %vm527 = vcmp.le.f32.partialorder %v519, %v525
    %v528 = vsel %vm526, 1e+30, %v518
    %v529 = vsel %vm527, 1e+30, %v519
    %v530 = vsel %vm464, %v528, inf
    %531 = vmin.xlane.f32.xlu0 %v530
    %v532 = vpop.xlane.xlu0 %531
    %v533 = vsel %vm468, %v529, inf
    %534 = vmin.xlane.f32.xlu0 %v533
    %v535 = vpop.xlane.xlu0 %534
    %vm536 = vcmp.le.f32.partialorder %v528, %v532
    %vm537 = vcmp.le.f32.partialorder %v529, %v535
    %v538 = vsel %vm536, 1e+30, %v528
    %v539 = vsel %vm537, 1e+30, %v529
    %v540 = vsel %vm464, %v538, inf
    %541 = vmin.xlane.f32.xlu0 %v540
    %v542 = vpop.xlane.xlu0 %541
    %v543 = vsel %vm468, %v539, inf
    %544 = vmin.xlane.f32.xlu0 %v543
    %v545 = vpop.xlane.xlu0 %544
    %vm546 = vcmp.le.f32.partialorder %v538, %v542
    %vm547 = vcmp.le.f32.partialorder %v539, %v545
    %v548 = vsel %vm546, 1e+30, %v538
    %v549 = vsel %vm547, 1e+30, %v539
    %v550 = vsel %vm464, %v548, inf
    %551 = vmin.xlane.f32.xlu0 %v550
    %v552 = vpop.xlane.xlu0 %551
    %v553 = vsel %vm468, %v549, inf
    %554 = vmin.xlane.f32.xlu0 %v553
    %v555 = vpop.xlane.xlu0 %554
    %vm556 = vcmp.gt.f32.partialorder %v497, %v552
    %vm557 = vcmp.gt.f32.partialorder %v499, %v555
    %v558 = vsel %vm556, %v497, 0.0
    %v559 = vsel %vm557, %v499, 0.0
    %560 = vrot.lane.b32.xlu0 %v238, 64
    %v561 = vpop.permute.xlu0 %560
    %562 = vrot.lane.b32.xlu0 %v239, 64
    %v563 = vpop.permute.xlu0 %562
    %v567 = vsel %vm464, %v558, 0
    %v570 = vsel %vm464, %v559, 0
    %572 = vmatprep.subr.mxu0 0.0
    %573 = vmatpush1.msra.mxu0 0.0
    %574 = vmatprep.subr.mxu0 0.0
    %575 = vmatpush1.msra.mxu0 0.0
    %576 = vmatprep.subr.mxu0 0.0
    %577 = vmatpush1.msra.mxu0 0.0
    %578 = vmatprep.subr.mxu0 0.0
    %579 = vmatpush1.msra.mxu0 0.0
    %580 = vmatprep.subr.mxu0 0.0
    %581 = vmatpush1.msra.mxu0 0.0
    %582 = vmatprep.subr.mxu0 0.0
    %583 = vmatpush1.msra.mxu0 0.0
    %584 = vmatprep.subr.mxu0 0.0
    %585 = vmatpush1.msra.mxu0 0.0
    %586 = vmatprep.subr.mxu0 0.0
    %587 = vmatpush1.msra.mxu0 0.0
    %588 = vmatprep.subr.mxu0 0.0
    %589 = vmatpush1.msra.mxu0 0.0
    %590 = vmatprep.subr.mxu0 0.0
    %591 = vmatpush1.msra.mxu0 0.0
    %592 = vmatprep.subr.mxu0 0.0
    %593 = vmatpush1.msra.mxu0 0.0
    %594 = vmatprep.subr.mxu0 0.0
    %595 = vmatpush1.msra.mxu0 0.0
    %596 = vmatprep.subr.mxu0 0.0
    %597 = vmatpush1.msra.mxu0 0.0
    %598 = vmatprep.subr.mxu0 0.0
    %599 = vmatpush1.msra.mxu0 0.0
    %600 = vmatprep.subr.mxu0 0.0
    %601 = vmatpush1.msra.mxu0 %v563
    %602 = vmatprep.subr.mxu0 0.0
    %603 = vmatpush1.msra.mxu0 %v561
    %604 = vmatprep.subr.mxu0 0.0
    %605 = vmatpush2.msra.mxu0 0.0
    %606 = vmatprep.subr.mxu0 0.0
    %607 = vmatpush2.msra.mxu0 0.0
    %608 = vmatprep.subr.mxu0 0.0
    %609 = vmatpush2.msra.mxu0 0.0
    %610 = vmatprep.subr.mxu0 0.0
    %611 = vmatpush2.msra.mxu0 0.0
    %612 = vmatprep.subr.mxu0 0.0
    %613 = vmatpush2.msra.mxu0 0.0
    %614 = vmatprep.subr.mxu0 0.0
    %615 = vmatpush2.msra.mxu0 0.0
    %616 = vmatprep.subr.mxu0 0.0
    %617 = vmatpush2.msra.mxu0 0.0
    %618 = vmatprep.subr.mxu0 0.0
    %619 = vmatpush2.msra.mxu0 0.0
    %620 = vmatprep.subr.mxu0 0.0
    %621 = vmatpush2.msra.mxu0 0.0
    %622 = vmatprep.subr.mxu0 0.0
    %623 = vmatpush2.msra.mxu0 0.0
    %624 = vmatprep.subr.mxu0 0.0
    %625 = vmatpush2.msra.mxu0 0.0
    %626 = vmatprep.subr.mxu0 0.0
    %627 = vmatpush2.msra.mxu0 0.0
    %628 = vmatprep.subr.mxu0 0.0
    %629 = vmatpush2.msra.mxu0 0.0
    %630 = vmatprep.subr.mxu0 0.0
    %631 = vmatpush2.msra.mxu0 0.0
    %632 = vmatprep.subr.mxu0 0.0
    %633 = vmatpush2.msra.mxu0 0.0
    %634 = vmatprep.subr.mxu0 0.0
    %635 = vmatpush2.msra.mxu0 0.0
    %636 = vmatprep.mubr.f32.mxu0 0.0
    %637 = vmatmul.mubr.f32.gmra.mxu0 %v567
    %v638 = vpop.f32.mrf.mxu0
    %v639 = vadd.f32 0.0, %v638
    %v640 = vpop.f32.mrf.mxu0
    %641 = vmatprep.mubr.f32.mxu0 0.0
    %642 = vmatmul.mubr.f32.gmra.mxu0 %v570
    %v643 = vpop.f32.mrf.mxu0
    %v644 = vadd.f32 0.0, %v643
    %v645 = vpop.f32.mrf.mxu0
    %646 = vdwg.mxu0
    %v647 = vld [vmem:[%s7] sm:$0xff]
    %v648 = vld [vmem:[%s7 + $0x8] sm:$0xff]
    %v649 = vld [vmem:[%s7 + $0x10] sm:$0xff]
    %v650 = vld [vmem:[%s7 + $0x18] sm:$0xff]
    %v651 = vld [vmem:[%s8] sm:$0xff]
    %v652 = vld [vmem:[%s8 + $0x8] sm:$0xff]
    %v653 = vld [vmem:[%s8 + $0x10] sm:$0xff]
    %v654 = vld [vmem:[%s8 + $0x18] sm:$0xff]
    %v656 = vsel %vm108, %v639, 0
    %v659 = vsel %vm108, %v644, 0
    %661 = vmatprep.subr.mxu0 0.0
    %662 = vmatpush1.msra.mxu0 0.0
    %663 = vmatprep.subr.mxu0 0.0
    %664 = vmatpush1.msra.mxu0 0.0
    %665 = vmatprep.subr.mxu0 0.0
    %666 = vmatpush1.msra.mxu0 0.0
    %667 = vmatprep.subr.mxu0 0.0
    %668 = vmatpush1.msra.mxu0 0.0
    %669 = vmatprep.subr.mxu0 0.0
    %670 = vmatpush1.msra.mxu0 0.0
    %671 = vmatprep.subr.mxu0 0.0
    %672 = vmatpush1.msra.mxu0 0.0
    %673 = vmatprep.subr.mxu0 0.0
    %674 = vmatpush1.msra.mxu0 0.0
    %675 = vmatprep.subr.mxu0 0.0
    %676 = vmatpush1.msra.mxu0 0.0
    %677 = vmatprep.subr.mxu0 0.0
    %678 = vmatpush1.msra.mxu0 0.0
    %679 = vmatprep.subr.mxu0 0.0
    %680 = vmatpush1.msra.mxu0 0.0
    %681 = vmatprep.subr.mxu0 0.0
    %682 = vmatpush1.msra.mxu0 0.0
    %683 = vmatprep.subr.mxu0 0.0
    %684 = vmatpush1.msra.mxu0 0.0
    %685 = vmatprep.subr.mxu0 0.0
    %686 = vmatpush1.msra.mxu0 %v654
    %687 = vmatprep.subr.mxu0 0.0
    %688 = vmatpush1.msra.mxu0 %v653
    %689 = vmatprep.subr.mxu0 0.0
    %690 = vmatpush1.msra.mxu0 %v652
    %691 = vmatprep.subr.mxu0 0.0
    %692 = vmatpush1.msra.mxu0 %v651
    %693 = vmatprep.subr.mxu0 0.0
    %694 = vmatpush2.msra.mxu0 0.0
    %695 = vmatprep.subr.mxu0 0.0
    %696 = vmatpush2.msra.mxu0 0.0
    %697 = vmatprep.subr.mxu0 0.0
    %698 = vmatpush2.msra.mxu0 0.0
    %699 = vmatprep.subr.mxu0 0.0
    %700 = vmatpush2.msra.mxu0 0.0
    %701 = vmatprep.subr.mxu0 0.0
    %702 = vmatpush2.msra.mxu0 0.0
    %703 = vmatprep.subr.mxu0 0.0
    %704 = vmatpush2.msra.mxu0 0.0
    %705 = vmatprep.subr.mxu0 0.0
    %706 = vmatpush2.msra.mxu0 0.0
    %707 = vmatprep.subr.mxu0 0.0
    %708 = vmatpush2.msra.mxu0 0.0
    %709 = vmatprep.subr.mxu0 0.0
    %710 = vmatpush2.msra.mxu0 0.0
    %711 = vmatprep.subr.mxu0 0.0
    %712 = vmatpush2.msra.mxu0 0.0
    %713 = vmatprep.subr.mxu0 0.0
    %714 = vmatpush2.msra.mxu0 0.0
    %715 = vmatprep.subr.mxu0 0.0
    %716 = vmatpush2.msra.mxu0 0.0
    %717 = vmatprep.subr.mxu0 0.0
    %718 = vmatpush2.msra.mxu0 0.0
    %719 = vmatprep.subr.mxu0 0.0
    %720 = vmatpush2.msra.mxu0 0.0
    %721 = vmatprep.subr.mxu0 0.0
    %722 = vmatpush2.msra.mxu0 0.0
    %723 = vmatprep.subr.mxu0 0.0
    %724 = vmatpush2.msra.mxu0 0.0
    %725 = vmatprep.mubr.f32.mxu0 0.0
    %726 = vmatmul.mubr.f32.gmra.mxu0 %v656
    %v727 = vpop.f32.mrf.mxu0
    %v728 = vadd.f32 0.0, %v727
    %v729 = vpop.f32.mrf.mxu0
    %730 = vmatprep.mubr.f32.mxu0 0.0
    %731 = vmatmul.mubr.f32.gmra.mxu0 %v659
    %v732 = vpop.f32.mrf.mxu0
    %v733 = vadd.f32 0.0, %v732
    %v734 = vpop.f32.mrf.mxu0
    %735 = vdwg.mxu0
    %736 = vmatprep.subr.mxu0 0.0
    %737 = vmatpush1.msra.mxu0 0.0
    %738 = vmatprep.subr.mxu0 0.0
    %739 = vmatpush1.msra.mxu0 0.0
    %740 = vmatprep.subr.mxu0 0.0
    %741 = vmatpush1.msra.mxu0 0.0
    %742 = vmatprep.subr.mxu0 0.0
    %743 = vmatpush1.msra.mxu0 0.0
    %744 = vmatprep.subr.mxu0 0.0
    %745 = vmatpush1.msra.mxu0 0.0
    %746 = vmatprep.subr.mxu0 0.0
    %747 = vmatpush1.msra.mxu0 0.0
    %748 = vmatprep.subr.mxu0 0.0
    %749 = vmatpush1.msra.mxu0 0.0
    %750 = vmatprep.subr.mxu0 0.0
    %751 = vmatpush1.msra.mxu0 0.0
    %752 = vmatprep.subr.mxu0 0.0
    %753 = vmatpush1.msra.mxu0 0.0
    %754 = vmatprep.subr.mxu0 0.0
    %755 = vmatpush1.msra.mxu0 0.0
    %756 = vmatprep.subr.mxu0 0.0
    %757 = vmatpush1.msra.mxu0 0.0
    %758 = vmatprep.subr.mxu0 0.0
    %759 = vmatpush1.msra.mxu0 0.0
    %760 = vmatprep.subr.mxu0 0.0
    %761 = vmatpush1.msra.mxu0 %v650
    %762 = vmatprep.subr.mxu0 0.0
    %763 = vmatpush1.msra.mxu0 %v649
    %764 = vmatprep.subr.mxu0 0.0
    %765 = vmatpush1.msra.mxu0 %v648
    %766 = vmatprep.subr.mxu0 0.0
    %767 = vmatpush1.msra.mxu0 %v647
    %768 = vmatprep.subr.mxu0 0.0
    %769 = vmatpush2.msra.mxu0 0.0
    %770 = vmatprep.subr.mxu0 0.0
    %771 = vmatpush2.msra.mxu0 0.0
    %772 = vmatprep.subr.mxu0 0.0
    %773 = vmatpush2.msra.mxu0 0.0
    %774 = vmatprep.subr.mxu0 0.0
    %775 = vmatpush2.msra.mxu0 0.0
    %776 = vmatprep.subr.mxu0 0.0
    %777 = vmatpush2.msra.mxu0 0.0
    %778 = vmatprep.subr.mxu0 0.0
    %779 = vmatpush2.msra.mxu0 0.0
    %780 = vmatprep.subr.mxu0 0.0
    %781 = vmatpush2.msra.mxu0 0.0
    %782 = vmatprep.subr.mxu0 0.0
    %783 = vmatpush2.msra.mxu0 0.0
    %784 = vmatprep.subr.mxu0 0.0
    %785 = vmatpush2.msra.mxu0 0.0
    %786 = vmatprep.subr.mxu0 0.0
    %787 = vmatpush2.msra.mxu0 0.0
    %788 = vmatprep.subr.mxu0 0.0
    %789 = vmatpush2.msra.mxu0 0.0
    %790 = vmatprep.subr.mxu0 0.0
    %791 = vmatpush2.msra.mxu0 0.0
    %792 = vmatprep.subr.mxu0 0.0
    %793 = vmatpush2.msra.mxu0 0.0
    %794 = vmatprep.subr.mxu0 0.0
    %795 = vmatpush2.msra.mxu0 0.0
    %796 = vmatprep.subr.mxu0 0.0
    %797 = vmatpush2.msra.mxu0 0.0
    %798 = vmatprep.subr.mxu0 0.0
    %799 = vmatpush2.msra.mxu0 0.0
    %800 = vmatprep.mubr.f32.mxu0 0.0
    %801 = vmatmul.mubr.f32.gmra.mxu0 %v289
    %v802 = vpop.f32.mrf.mxu0
    %v803 = vadd.f32 %v728, %v802
    %v804 = vpop.f32.mrf.mxu0
    %805 = vmatprep.mubr.f32.mxu0 0.0
    %806 = vmatmul.mubr.f32.gmra.mxu0 %v292
    %v807 = vpop.f32.mrf.mxu0
    %v808 = vadd.f32 %v733, %v807
    %v809 = vpop.f32.mrf.mxu0
    %810 = vdwg.mxu0
    %v811 = vlaneseq
    %v812 = vshrl.u32 %v811, 7
    %v813 = vsub.s32 0, %v812
    %v814 = vrot.slane %v240, %v813
    %v815 = vadd.f32 %v803, %v814
    %v816 = vadd.f32 %v808, %v814
    %v817 = vmax.f32 %v815, 0.0
    %v818 = vmax.f32 %v816, 0.0
    %v819 = vld [vmem:[%s9] sm:$0xff]
    %v820 = vld [vmem:[%s9 + $0x8] sm:$0xff]
    %v821 = vld [vmem:[%s9 + $0x10] sm:$0xff]
    %v822 = vld [vmem:[%s9 + $0x18] sm:$0xff]
    %v823 = vld [vmem:[%s9 + $0x20] sm:$0xff]
    %v824 = vld [vmem:[%s9 + $0x28] sm:$0xff]
    %v825 = vld [vmem:[%s9 + $0x30] sm:$0xff]
    %v826 = vld [vmem:[%s9 + $0x38] sm:$0xff]
    %v827 = vld [vmem:[%s9 + $0x40] sm:$0xff]
    %v828 = vld [vmem:[%s9 + $0x48] sm:$0xff]
    %v829 = vld [vmem:[%s9 + $0x50] sm:$0xff]
    %v830 = vld [vmem:[%s9 + $0x58] sm:$0xff]
    %v831 = vld [vmem:[%s9 + $0x60] sm:$0xff]
    %v832 = vld [vmem:[%s9 + $0x68] sm:$0xff]
    %v833 = vld [vmem:[%s9 + $0x70] sm:$0xff]
    %v834 = vld [vmem:[%s9 + $0x78] sm:$0xff]
    %v835 = vlaneseq
    %v836 = vshrl.u32 %v835, 7
    %v837 = vsub.s32 0, %v836
    %v838 = vrot.slane %v87, %v837
    %839 = vmatprep.subr.mxu0 0.0
    %840 = vmatpush1.msra.mxu0 %v834
    %841 = vmatprep.subr.mxu0 0.0
    %842 = vmatpush1.msra.mxu0 %v833
    %843 = vmatprep.subr.mxu0 0.0
    %844 = vmatpush1.msra.mxu0 %v832
    %845 = vmatprep.subr.mxu0 0.0
    %846 = vmatpush1.msra.mxu0 %v831
    %847 = vmatprep.subr.mxu0 0.0
    %848 = vmatpush1.msra.mxu0 %v830
    %849 = vmatprep.subr.mxu0 0.0
    %850 = vmatpush1.msra.mxu0 %v829
    %851 = vmatprep.subr.mxu0 0.0
    %852 = vmatpush1.msra.mxu0 %v828
    %853 = vmatprep.subr.mxu0 0.0
    %854 = vmatpush1.msra.mxu0 %v827
    %855 = vmatprep.subr.mxu0 0.0
    %856 = vmatpush1.msra.mxu0 %v826
    %857 = vmatprep.subr.mxu0 0.0
    %858 = vmatpush1.msra.mxu0 %v825
    %859 = vmatprep.subr.mxu0 0.0
    %860 = vmatpush1.msra.mxu0 %v824
    %861 = vmatprep.subr.mxu0 0.0
    %862 = vmatpush1.msra.mxu0 %v823
    %863 = vmatprep.subr.mxu0 0.0
    %864 = vmatpush1.msra.mxu0 %v822
    %865 = vmatprep.subr.mxu0 0.0
    %866 = vmatpush1.msra.mxu0 %v821
    %867 = vmatprep.subr.mxu0 0.0
    %868 = vmatpush1.msra.mxu0 %v820
    %869 = vmatprep.subr.mxu0 0.0
    %870 = vmatpush1.msra.mxu0 %v819
    %871 = vmatprep.subr.mxu0 0.0
    %872 = vmatpush2.msra.mxu0 0.0
    %873 = vmatprep.subr.mxu0 0.0
    %874 = vmatpush2.msra.mxu0 0.0
    %875 = vmatprep.subr.mxu0 0.0
    %876 = vmatpush2.msra.mxu0 0.0
    %877 = vmatprep.subr.mxu0 0.0
    %878 = vmatpush2.msra.mxu0 0.0
    %879 = vmatprep.subr.mxu0 0.0
    %880 = vmatpush2.msra.mxu0 0.0
    %881 = vmatprep.subr.mxu0 0.0
    %882 = vmatpush2.msra.mxu0 0.0
    %883 = vmatprep.subr.mxu0 0.0
    %884 = vmatpush2.msra.mxu0 0.0
    %885 = vmatprep.subr.mxu0 0.0
    %886 = vmatpush2.msra.mxu0 0.0
    %887 = vmatprep.subr.mxu0 0.0
    %888 = vmatpush2.msra.mxu0 0.0
    %889 = vmatprep.subr.mxu0 0.0
    %890 = vmatpush2.msra.mxu0 0.0
    %891 = vmatprep.subr.mxu0 0.0
    %892 = vmatpush2.msra.mxu0 0.0
    %893 = vmatprep.subr.mxu0 0.0
    %894 = vmatpush2.msra.mxu0 0.0
    %895 = vmatprep.subr.mxu0 0.0
    %896 = vmatpush2.msra.mxu0 0.0
    %897 = vmatprep.subr.mxu0 0.0
    %898 = vmatpush2.msra.mxu0 0.0
    %899 = vmatprep.subr.mxu0 0.0
    %900 = vmatpush2.msra.mxu0 0.0
    %901 = vmatprep.subr.mxu0 0.0
    %902 = vmatpush2.msra.mxu0 0.0
    %903 = vmatprep.mubr.f32.mxu0 0.0
    %904 = vmatmul.mubr.f32.gmra.mxu0 %v817
    %v905 = vpop.f32.mrf.mxu0
    %v906 = vadd.f32 %v838, %v905
    %v907 = vpop.f32.mrf.mxu0
    %908 = vmatprep.mubr.f32.mxu0 0.0
    %909 = vmatmul.mubr.f32.gmra.mxu0 %v818
    %v910 = vpop.f32.mrf.mxu0
    %v911 = vadd.f32 %v838, %v910
    %v912 = vpop.f32.mrf.mxu0
    %913 = vdwg.mxu0
    %v914 = vld [vmem:[%s6] sm:$0xff]
    %v915 = vld [vmem:[%s6 + $0x8] sm:$0xff]
    %v916 = vld [vmem:[%s6 + $0x10] sm:$0xff]
    %v917 = vld [vmem:[%s6 + $0x18] sm:$0xff]
    %v918 = vlaneseq
    %v919 = vshrl.u32 %v918, 7
    %v920 = vsub.s32 0, %v919
    %v921 = vrot.slane %v86, %v920
    %v923 = vsel %vm108, %v906, 0
    %v926 = vsel %vm108, %v911, 0
    %928 = vmatprep.subr.mxu0 0.0
    %929 = vmatpush1.msra.mxu0 0.0
    %930 = vmatprep.subr.mxu0 0.0
    %931 = vmatpush1.msra.mxu0 0.0
    %932 = vmatprep.subr.mxu0 0.0
    %933 = vmatpush1.msra.mxu0 0.0
    %934 = vmatprep.subr.mxu0 0.0
    %935 = vmatpush1.msra.mxu0 0.0
    %936 = vmatprep.subr.mxu0 0.0
    %937 = vmatpush1.msra.mxu0 0.0
    %938 = vmatprep.subr.mxu0 0.0
    %939 = vmatpush1.msra.mxu0 0.0
    %940 = vmatprep.subr.mxu0 0.0
    %941 = vmatpush1.msra.mxu0 0.0
    %942 = vmatprep.subr.mxu0 0.0
    %943 = vmatpush1.msra.mxu0 0.0
    %944 = vmatprep.subr.mxu0 0.0
    %945 = vmatpush1.msra.mxu0 0.0
    %946 = vmatprep.subr.mxu0 0.0
    %947 = vmatpush1.msra.mxu0 0.0
    %948 = vmatprep.subr.mxu0 0.0
    %949 = vmatpush1.msra.mxu0 0.0
    %950 = vmatprep.subr.mxu0 0.0
    %951 = vmatpush1.msra.mxu0 0.0
    %952 = vmatprep.subr.mxu0 0.0
    %953 = vmatpush1.msra.mxu0 %v917
    %954 = vmatprep.subr.mxu0 0.0
    %955 = vmatpush1.msra.mxu0 %v916
    %956 = vmatprep.subr.mxu0 0.0
    %957 = vmatpush1.msra.mxu0 %v915
    %958 = vmatprep.subr.mxu0 0.0
    %959 = vmatpush1.msra.mxu0 %v914
    %960 = vmatprep.subr.mxu0 0.0
    %961 = vmatpush2.msra.mxu0 0.0
    %962 = vmatprep.subr.mxu0 0.0
    %963 = vmatpush2.msra.mxu0 0.0
    %964 = vmatprep.subr.mxu0 0.0
    %965 = vmatpush2.msra.mxu0 0.0
    %966 = vmatprep.subr.mxu0 0.0
    %967 = vmatpush2.msra.mxu0 0.0
    %968 = vmatprep.subr.mxu0 0.0
    %969 = vmatpush2.msra.mxu0 0.0
    %970 = vmatprep.subr.mxu0 0.0
    %971 = vmatpush2.msra.mxu0 0.0
    %972 = vmatprep.subr.mxu0 0.0
    %973 = vmatpush2.msra.mxu0 0.0
    %974 = vmatprep.subr.mxu0 0.0
    %975 = vmatpush2.msra.mxu0 0.0
    %976 = vmatprep.subr.mxu0 0.0
    %977 = vmatpush2.msra.mxu0 0.0
    %978 = vmatprep.subr.mxu0 0.0
    %979 = vmatpush2.msra.mxu0 0.0
    %980 = vmatprep.subr.mxu0 0.0
    %981 = vmatpush2.msra.mxu0 0.0
    %982 = vmatprep.subr.mxu0 0.0
    %983 = vmatpush2.msra.mxu0 0.0
    %984 = vmatprep.subr.mxu0 0.0
    %985 = vmatpush2.msra.mxu0 0.0
    %986 = vmatprep.subr.mxu0 0.0
    %987 = vmatpush2.msra.mxu0 0.0
    %988 = vmatprep.subr.mxu0 0.0
    %989 = vmatpush2.msra.mxu0 0.0
    %990 = vmatprep.subr.mxu0 0.0
    %991 = vmatpush2.msra.mxu0 0.0
    %992 = vmatprep.mubr.f32.mxu0 0.0
    %993 = vmatmul.mubr.f32.gmra.mxu0 %v923
    %v994 = vpop.f32.mrf.mxu0
    %v995 = vadd.f32 %v921, %v994
    %v996 = vpop.f32.mrf.mxu0
    %997 = vmatprep.mubr.f32.mxu0 0.0
    %998 = vmatmul.mubr.f32.gmra.mxu0 %v926
    %v999 = vpop.f32.mrf.mxu0
    %v1000 = vadd.f32 %v921, %v999
    %v1001 = vpop.f32.mrf.mxu0
    %1002 = vdwg.mxu0
    %v1003 = vmax.f32 %v995, 0.0
    %v1004 = vmax.f32 %v1000, 0.0
    %v1006 = vsel %vm108, %v230, 0
    %v1009 = vsel %vm108, %v235, 0
    %v1012 = vsel %vm108, %v1003, 0
    %v1015 = vsel %vm108, %v1004, 0
    %1017 = vmatprep.subr.mxu0 0.0
    %1018 = vmatpush1.xpose.msra.mxu0 0.0
    %1019 = vmatprep.subr.mxu0 0.0
    %1020 = vmatpush1.xpose.msra.mxu0 0.0
    %1021 = vmatprep.subr.mxu0 0.0
    %1022 = vmatpush1.xpose.msra.mxu0 0.0
    %1023 = vmatprep.subr.mxu0 0.0
    %1024 = vmatpush1.xpose.msra.mxu0 0.0
    %1025 = vmatprep.subr.mxu0 0.0
    %1026 = vmatpush1.xpose.msra.mxu0 0.0
    %1027 = vmatprep.subr.mxu0 0.0
    %1028 = vmatpush1.xpose.msra.mxu0 0.0
    %1029 = vmatprep.subr.mxu0 0.0
    %1030 = vmatpush1.xpose.msra.mxu0 0.0
    %1031 = vmatprep.subr.mxu0 0.0
    %1032 = vmatpush1.xpose.msra.mxu0 0.0
    %1033 = vmatprep.subr.mxu0 0.0
    %1034 = vmatpush1.xpose.msra.mxu0 0.0
    %1035 = vmatprep.subr.mxu0 0.0
    %1036 = vmatpush1.xpose.msra.mxu0 0.0
    %1037 = vmatprep.subr.mxu0 0.0
    %1038 = vmatpush1.xpose.msra.mxu0 0.0
    %1039 = vmatprep.subr.mxu0 0.0
    %1040 = vmatpush1.xpose.msra.mxu0 0.0
    %1041 = vmatprep.subr.mxu0 0.0
    %1042 = vmatpush1.xpose.msra.mxu0 0.0
    %1043 = vmatprep.subr.mxu0 0.0
    %1044 = vmatpush1.xpose.msra.mxu0 0.0
    %1045 = vmatprep.subr.mxu0 0.0
    %1046 = vmatpush1.xpose.msra.mxu0 %v1015
    %1047 = vmatprep.subr.mxu0 0.0
    %1048 = vmatpush1.xpose.msra.mxu0 %v1012
    %1049 = vmatprep.subr.mxu0 0.0
    %1050 = vmatpush2.xpose.msra.mxu0 0.0
    %1051 = vmatprep.subr.mxu0 0.0
    %1052 = vmatpush2.xpose.msra.mxu0 0.0
    %1053 = vmatprep.subr.mxu0 0.0
    %1054 = vmatpush2.xpose.msra.mxu0 0.0
    %1055 = vmatprep.subr.mxu0 0.0
    %1056 = vmatpush2.xpose.msra.mxu0 0.0
    %1057 = vmatprep.subr.mxu0 0.0
    %1058 = vmatpush2.xpose.msra.mxu0 0.0
    %1059 = vmatprep.subr.mxu0 0.0
    %1060 = vmatpush2.xpose.msra.mxu0 0.0
    %1061 = vmatprep.subr.mxu0 0.0
    %1062 = vmatpush2.xpose.msra.mxu0 0.0
    %1063 = vmatprep.subr.mxu0 0.0
    %1064 = vmatpush2.xpose.msra.mxu0 0.0
    %1065 = vmatprep.subr.mxu0 0.0
    %1066 = vmatpush2.xpose.msra.mxu0 0.0
    %1067 = vmatprep.subr.mxu0 0.0
    %1068 = vmatpush2.xpose.msra.mxu0 0.0
    %1069 = vmatprep.subr.mxu0 0.0
    %1070 = vmatpush2.xpose.msra.mxu0 0.0
    %1071 = vmatprep.subr.mxu0 0.0
    %1072 = vmatpush2.xpose.msra.mxu0 0.0
    %1073 = vmatprep.subr.mxu0 0.0
    %1074 = vmatpush2.xpose.msra.mxu0 0.0
    %1075 = vmatprep.subr.mxu0 0.0
    %1076 = vmatpush2.xpose.msra.mxu0 0.0
    %1077 = vmatprep.subr.mxu0 0.0
    %1078 = vmatpush2.xpose.msra.mxu0 0.0
    %1079 = vmatprep.subr.mxu0 0.0
    %1080 = vmatpush2.xpose.msra.mxu0 0.0
    %1081 = vmatprep.mubr.f32.mxu0 0.0
    %1082 = vmatmul.mubr.f32.gmra.mxu0 %v1006
    %v1083 = vpop.f32.mrf.mxu0
    %v1084 = vadd.f32 0.0, %v1083
    %v1085 = vpop.f32.mrf.mxu0
    %1086 = vmatprep.mubr.f32.mxu0 0.0
    %1087 = vmatmul.mubr.f32.gmra.mxu0 %v1009
    %v1088 = vpop.f32.mrf.mxu0
    %v1089 = vadd.f32 0.0, %v1088
    %v1090 = vpop.f32.mrf.mxu0
    %1091 = vdwg.mxu0
    %v1092 = vmul.f32 %v1084, 0.17677669
    %v1093 = vmul.f32 %v1089, 0.17677669
    %vm1094 = vcmask 97280
    %v1095 = vsel %vm1094, %v1092, -inf
    %1096 = vmax.xlane.f32.xlu0 %v1095
    %v1097 = vpop.xlane.xlu0 %1096
    %v1098 = vsel %vm1094, %v1093, -inf
    %1099 = vmax.xlane.f32.xlu0 %v1098
    %v1100 = vpop.xlane.xlu0 %1099
    %v1101 = vsub.f32 %v1092, %v1097
    %v1102 = vsub.f32 %v1093, %v1100
    %v1103 = vmul.f32 %v1101, 1.442695
    %v1104 = vpow.pop %v1103
    %v1105 = vmul.f32 %v1102, 1.442695
    %v1106 = vpow.pop %v1105
    %v1107 = vsel %vm1094, %v1104, 0.0
    %1108 = vadd.xlane.f32.xlu0 %v1107
    %v1109 = vpop.xlane.xlu0 %1108
    %v1110 = vsel %vm1094, %v1106, 0.0
    %1111 = vadd.xlane.f32.xlu0 %v1110
    %v1112 = vpop.xlane.xlu0 %1111
    %v1113 = vrcp.pop %v1109
    %v1114 = vmul.f32 %v1104, %v1113
    %v1115 = vrcp.pop %v1112
    %v1116 = vmul.f32 %v1106, %v1115
    %v1117 = vsel %vm1094, %v1114, inf
    %1118 = vmin.xlane.f32.xlu0 %v1117
    %v1119 = vpop.xlane.xlu0 %1118
    %v1120 = vsel %vm1094, %v1116, inf
    %1121 = vmin.xlane.f32.xlu0 %v1120
    %v1122 = vpop.xlane.xlu0 %1121
    %vm1123 = vcmp.le.f32.partialorder %v1114, %v1119
    %vm1124 = vcmp.le.f32.partialorder %v1116, %v1122
    %v1125 = vsel %vm1123, 1e+30, %v1114
    %v1126 = vsel %vm1124, 1e+30, %v1116
    %v1127 = vsel %vm1094, %v1125, inf
    %1128 = vmin.xlane.f32.xlu0 %v1127
    %v1129 = vpop.xlane.xlu0 %1128
    %v1130 = vsel %vm1094, %v1126, inf
    %1131 = vmin.xlane.f32.xlu0 %v1130
    %v1132 = vpop.xlane.xlu0 %1131
    %vm1133 = vcmp.gt.f32.partialorder %v1114, %v1129
    %vm1134 = vcmp.gt.f32.partialorder %v1116, %v1132
    %v1135 = vsel %vm1133, %v1114, 0.0
    %v1136 = vsel %vm1134, %v1116, 0.0
    %1137 = vst.msk [vmem:[#allocation8] sm:$0xff] %vm108, %v906
    %1138 = vst.msk [vmem:[#allocation8 + $0x8] sm:$0xf] %vm244, %v911
    %1139 = vst.msk [vmem:[#allocation9] sm:$0xff] %vm1094, %v1135
    %1140 = vst.msk [vmem:[#allocation9 + $0x8] sm:$0xff] %vm1094, %v1136
    %1141 = vst.msk [vmem:[#allocation11] sm:$0xff] %vm1094, %v1092
    %1142 = vst.msk [vmem:[#allocation11 + $0x8] sm:$0xff] %vm1094, %v1093
    // Predicated region
    $region54: #{tpu_custom_call.1} parent=1 // pred_check
      _
    $region55: #{tpu_custom_call.1} parent=1 // pred_check_branch
      %1144 = sbr.rel (0) target = $region57
    $region56: #{tpu_custom_call.1} parent=1 // pred_region
      %s1146 = ssub.s32 256, 256
      %1147 = vsyncadd [#allocation4], %s1146
      %s1148 = sshll.u32 [#allocation8], 4
      %s1149 = int_to_ptr.vmem [resolvable:$true] %s1148
      %1154 = dma.vmem_to_hbm [thread:$0]  %s1149, 256, %s10, [#allocation4], 128, 128, 8
    $region57: #{tpu_custom_call.1} parent=1 // pred_fallthru
      _
    // Predicated region
    $region58: #{tpu_custom_call.1} parent=1 // pred_check
      _
    $region59: #{tpu_custom_call.1} parent=1 // pred_check_branch
      %1156 = sbr.rel (0) target = $region61
    $region60: #{tpu_custom_call.1} parent=1 // pred_region
      %s1158 = ssub.s32 256, 256
      %1159 = vsyncadd [#allocation10], %s1158
      %s1160 = sshll.u32 [#allocation9], 4
      %s1161 = int_to_ptr.vmem [resolvable:$true] %s1160
      %1166 = dma.vmem_to_hbm [thread:$0]  %s1161, 256, %s11, [#allocation10], 128, 128, 8
    $region61: #{tpu_custom_call.1} parent=1 // pred_fallthru
      _
    // Predicated region
    $region62: #{tpu_custom_call.1} parent=1 // pred_check
      _
    $region63: #{tpu_custom_call.1} parent=1 // pred_check_branch
      %1168 = sbr.rel (0) target = $region65
    $region64: #{tpu_custom_call.1} parent=1 // pred_region
      %s1170 = ssub.s32 256, 256
      %1171 = vsyncadd [#allocation10], %s1170
      %s1172 = sshll.u32 [#allocation11], 4
      %s1173 = int_to_ptr.vmem [resolvable:$true] %s1172
      %1178 = dma.vmem_to_hbm [thread:$0]  %s1173, 256, %s12, [#allocation10], 128, 128, 8
    $region65: #{tpu_custom_call.1} parent=1 // pred_fallthru
      _
    // Predicated region
    $region66: #{tpu_custom_call.1} parent=1 // pred_check
      _
    $region67: #{tpu_custom_call.1} parent=1 // pred_check_branch
      %1180 = sbr.rel (0) target = $region69
    $region68: #{tpu_custom_call.1} parent=1 // pred_region
      %1181 = dma.done [#allocation4], 256
    $region69: #{tpu_custom_call.1} parent=1 // pred_fallthru
      _
    // Predicated region
    $region70: #{tpu_custom_call.1} parent=1 // pred_check
      _
    $region71: #{tpu_custom_call.1} parent=1 // pred_check_branch
      %1183 = sbr.rel (0) target = $region73
    $region72: #{tpu_custom_call.1} parent=1 // pred_region
      %1184 = dma.done [#allocation10], 256
    $region73: #{tpu_custom_call.1} parent=1 // pred_fallthru
      _
    // Predicated region
    $region74: #{tpu_custom_call.1} parent=1 // pred_check
      _
    $region75: #{tpu_custom_call.1} parent=1 // pred_check_branch
      %1186 = sbr.rel (0) target = $region77
    $region76: #{tpu_custom_call.1} parent=1 // pred_region
      %1187 = dma.done [#allocation10], 256
    $region77: #{tpu_custom_call.1} parent=1 // pred_fallthru
      _
    %1188 = vsyncpa [#allocation3], 1
    %1189 = vsyncpa [#allocation6], 1
    %1190 = vsyncpa [#allocation4], 1
    %1191 = vsyncpa [#allocation10], 1

</llo_original>
